<compile_context>
chip_gen: v5e
topology: v5e:2x2
jax: 0.10.0
libtpu: 0.0.40
codegen_flags: <defaults>
</compile_context>

<pallas_src>
import functools

import jax
import jax.numpy as jnp
from jax import lax
from jax.experimental import pallas as pl
from jax.experimental.pallas import tpu as pltpu


def mha_kernel(q_ref, k_ref, v_ref, wq_ref, wk_ref, wv_ref, wfc_ref,
               gamma_ref, beta_ref, out_ref, attn_ref, *,
               n_head, d_k, d_v, sz_b, len_q, len_k, len_v, d_model):
    """Whole batch per invocation; B folded into matmul M; head-batched core."""
    f32 = jnp.float32
    bf16 = jnp.bfloat16
    h_dv = n_head * d_v

    # Inputs arrive in bf16; fold batch into the M dimension of the matmuls.
    xq = q_ref[...].reshape(sz_b * len_q, d_model)            # (B*Lq, Dm) bf16
    xk = k_ref[...].reshape(sz_b * len_k, d_model)            # (B*Lk, Dm) bf16
    xv = v_ref[...].reshape(sz_b * len_v, d_model)            # (B*Lv, Dm) bf16
    residual = xq.astype(f32)                                 # (B*Lq, Dm) f32

    # ---- Q/K/V projections: three exact-size bf16 MXU matmuls (no wasted
    # off-diagonal blocks).  1/sqrt(d_k) is already folded into wq_ref columns.
    q_p = jnp.dot(xq, wq_ref[...], preferred_element_type=f32)   # (B*Lq, H*dk)
    k_p = jnp.dot(xk, wk_ref[...], preferred_element_type=f32)   # (B*Lk, H*dk)
    v_p = jnp.dot(xv, wv_ref[...], preferred_element_type=f32)   # (B*Lv, H*dv)

    # ---- Attention core: per-batch (static unroll over B), all heads batched
    # in a single leading-head einsum.
    ctx_rows = []
    for b in range(sz_b):
        qh = q_p[b * len_q:(b + 1) * len_q].reshape(len_q, n_head, d_k).transpose(1, 0, 2)
        kh = k_p[b * len_k:(b + 1) * len_k].reshape(len_k, n_head, d_k).transpose(1, 0, 2)
        vh = v_p[b * len_v:(b + 1) * len_v].reshape(len_v, n_head, d_v).transpose(1, 0, 2)
        # TODO(synk): the head-major relayout above is the remaining XLU/VMEM
        #             overhead; a flash-tiled layout with a head grid axis
        #             removes it at production sizes.

        scores = jnp.einsum('hqd,hkd->hqk', qh.astype(bf16), kh.astype(bf16),
                            preferred_element_type=f32)          # (H, Lq, Lk)
        # TODO(synk): mask handling (mask is None in this forward path).
        m = jnp.max(scores, axis=-1, keepdims=True)
        p = jnp.exp(scores - m)
        denom = jnp.sum(p, axis=-1, keepdims=True)
        # EUP approx reciprocal: rows sum to 1 only to ~1e-3 relative (inference OK).
        attn = p * pl.reciprocal(denom, approx=True)
        # TODO(synk): attention dropout omitted (eval-mode identity).
        attn_ref[b] = attn.astype(attn_ref.dtype)                # bf16 writeback

        ctx = jnp.einsum('hqk,hkd->hqd', attn.astype(bf16), vh.astype(bf16),
                         preferred_element_type=f32)             # (H, Lq, dv)
        ctx_rows.append(ctx.transpose(1, 0, 2).reshape(len_q, h_dv))

    ctx_flat = jnp.concatenate(ctx_rows, axis=0)                 # (B*Lq, H*dv)

    # ---- Output projection on the batch-folded M dimension: one MXU matmul.
    out = jnp.dot(ctx_flat.astype(bf16), wfc_ref[...],
                  preferred_element_type=f32)                    # (B*Lq, Dm)
    # TODO(synk): output dropout omitted (eval-mode identity).

    # ---- Residual + LayerNorm(eps=1e-6): centered two-pass variance, f32 math.
    y = out + residual
    mean = jnp.mean(y, axis=-1, keepdims=True)
    yc = y - mean
    var = jnp.mean(yc * yc, axis=-1, keepdims=True)
    y = yc * lax.rsqrt(var + 1e-6)
    y = y * gamma_ref[...] + beta_ref[...]
    out_ref[...] = y.reshape(sz_b, len_q, d_model).astype(out_ref.dtype)


def multi_head_attention(q, k, v, wq, wk, wv, wfc, gamma, beta,
                         *, n_head, d_k, d_v):
    """Eval-mode forward of SubLayers.MultiHeadAttention (mask=None).

    Returns (out f32 (B, Lq, Dm), attn bf16 (B, H, Lq, Lk)).
    Activations / weights are cast to bf16 for the MXU (f32 accumulation).
    """
    B, len_q, d_model = q.shape
    len_k = k.shape[1]
    len_v = v.shape[1]
    h_dk = n_head * d_k
    h_dv = n_head * d_v
    bf16 = jnp.bfloat16

    # PyTorch Linear weight layout is (out, in); transpose once, cast to bf16.
    # 1/sqrt(d_k) folded into W_q in f32, before the bf16 cast.
    wq_t = (wq.astype(jnp.float32).T * (1.0 / (d_k ** 0.5))).astype(bf16)  # (Dm, H*dk)
    wk_t = wk.T.astype(bf16)                                               # (Dm, H*dk)
    wv_t = wv.T.astype(bf16)                                               # (Dm, H*dv)
    wfc_t = wfc.T.astype(bf16)                                             # (H*dv, Dm)

    qb = q.astype(bf16)
    kb = k.astype(bf16)
    vb = v.astype(bf16)
    gamma = gamma.astype(jnp.float32)
    beta = beta.astype(jnp.float32)

    kernel = functools.partial(
        mha_kernel, n_head=n_head, d_k=d_k, d_v=d_v,
        sz_b=B, len_q=len_q, len_k=len_k, len_v=len_v, d_model=d_model)

    out_shape = (
        jax.ShapeDtypeStruct((B, len_q, d_model), jnp.float32),
        jax.ShapeDtypeStruct((B, n_head, len_q, len_k), jnp.bfloat16),
    )
    in_specs = [
        pl.BlockSpec((B, len_q, d_model), lambda i: (0, 0, 0)),    # q (bf16)
        pl.BlockSpec((B, len_k, d_model), lambda i: (0, 0, 0)),    # k (bf16)
        pl.BlockSpec((B, len_v, d_model), lambda i: (0, 0, 0)),    # v (bf16)
        pl.BlockSpec((d_model, h_dk), lambda i: (0, 0)),           # W_q^T * 1/sqrt(dk)
        pl.BlockSpec((d_model, h_dk), lambda i: (0, 0)),           # W_k^T
        pl.BlockSpec((d_model, h_dv), lambda i: (0, 0)),           # W_v^T
        pl.BlockSpec((h_dv, d_model), lambda i: (0, 0)),           # fc^T
        pl.BlockSpec((1, d_model), lambda i: (0, 0)),              # LN gamma
        pl.BlockSpec((1, d_model), lambda i: (0, 0)),              # LN beta
    ]
    out_specs = (
        pl.BlockSpec((B, len_q, d_model), lambda i: (0, 0, 0)),
        pl.BlockSpec((B, n_head, len_q, len_k), lambda i: (0, 0, 0, 0)),
    )

    return pl.pallas_call(
        kernel,
        out_shape=out_shape,
        grid=(1,),                 # whole batch in one step (B folded into M)
        in_specs=in_specs,
        out_specs=out_specs,
        compiler_params=pltpu.CompilerParams(
            dimension_semantics=("arbitrary",)),
    )(qb, kb, vb, wq_t, wk_t, wv_t, wfc_t, gamma, beta)


def mha_reference(q, k, v, wq, wk, wv, wfc, gamma, beta, *, n_head, d_k, d_v):
    """Pure-JAX reference mirroring the PyTorch forward (eval mode, mask=None).

    Mirrors the kernel's precision choices (bf16 inputs / bf16 MXU operands with
    f32 accumulation) so the comparison tolerance stays tight.
    """
    bf, f32 = jnp.bfloat16, jnp.float32
    B, len_q, _ = q.shape
    len_k = k.shape[1]
    len_v = v.shape[1]
    qb, kb, vb = q.astype(bf), k.astype(bf), v.astype(bf)
    residual = qb.astype(f32)
    Q = jnp.einsum('bld,ed->ble', qb, wq.astype(bf), preferred_element_type=f32)
    K = jnp.einsum('bld,ed->ble', kb, wk.astype(bf), preferred_element_type=f32)
    V = jnp.einsum('bld,ed->ble', vb, wv.astype(bf), preferred_element_type=f32)
    Q = Q.reshape(B, len_q, n_head, d_k).transpose(0, 2, 1, 3)
    K = K.reshape(B, len_k, n_head, d_k).transpose(0, 2, 1, 3)
    V = V.reshape(B, len_v, n_head, d_v).transpose(0, 2, 1, 3)
    scores = jnp.einsum('bhqd,bhkd->bhqk', Q.astype(bf), K.astype(bf),
                        preferred_element_type=f32) / (d_k ** 0.5)
    attn = jax.nn.softmax(scores, axis=-1)
    ctx = jnp.einsum('bhqk,bhkd->bhqd', attn.astype(bf), V.astype(bf),
                     preferred_element_type=f32)
    ctx = ctx.transpose(0, 2, 1, 3).reshape(B, len_q, n_head * d_v)
    out = jnp.einsum('ble,de->bld', ctx.astype(bf), wfc.astype(bf),
                     preferred_element_type=f32) + residual
    mean = jnp.mean(out, axis=-1, keepdims=True)
    var = jnp.mean((out - mean) ** 2, axis=-1, keepdims=True)
    out = (out - mean) / jnp.sqrt(var + 1e-6)
    out = out * gamma[0] + beta[0]
    return out, attn


if __name__ == "__main__":
    # Small shapes consistent with the module: batch=2, seq=8, d_model=32,
    # n_head=4, d_k=d_v=8.
    B, L, Dm = 2, 8, 32
    n_head, d_k, d_v = 4, 8, 8

    key = jax.random.PRNGKey(0)
    kq, kk, kv, kwq, kwk, kwv, kwf = jax.random.split(key, 7)

    q = jax.random.normal(kq, (B, L, Dm), jnp.float32)
    k = jax.random.normal(kk, (B, L, Dm), jnp.float32)
    v = jax.random.normal(kv, (B, L, Dm), jnp.float32)

    # PyTorch Linear weight layout: (out_features, in_features).
    scale_w = 1.0 / (Dm ** 0.5)
    wq = jax.random.normal(kwq, (n_head * d_k, Dm), jnp.float32) * scale_w
    wk = jax.random.normal(kwk, (n_head * d_k, Dm), jnp.float32) * scale_w
    wv = jax.random.normal(kwv, (n_head * d_v, Dm), jnp.float32) * scale_w
    wfc = jax.random.normal(kwf, (Dm, n_head * d_v), jnp.float32) * scale_w
    gamma = jnp.ones((1, Dm), jnp.float32)   # LayerNorm default init
    beta = jnp.zeros((1, Dm), jnp.float32)

    out, attn = multi_head_attention(
        q, k, v, wq, wk, wv, wfc, gamma, beta,
        n_head=n_head, d_k=d_k, d_v=d_v)
    out = jax.block_until_ready(out)
    attn = jax.block_until_ready(attn)

    ref_out, ref_attn = mha_reference(
        q, k, v, wq, wk, wv, wfc, gamma, beta,
        n_head=n_head, d_k=d_k, d_v=d_v)

    assert out.shape == (B, L, Dm) and out.dtype == jnp.float32
    assert attn.shape == (B, n_head, L, L)
    attn_f32 = attn.astype(jnp.float32)
    # Tolerance covers the approx (EUP) reciprocal, bf16 attn writeback, and
    # f32 accumulation-order differences; matmul precision matches the ref.
    assert jnp.allclose(attn_f32, ref_attn, atol=2e-2, rtol=2e-2), \
        float(jnp.max(jnp.abs(attn_f32 - ref_attn)))
    assert jnp.allclose(out, ref_out, atol=2e-2, rtol=2e-2), \
        float(jnp.max(jnp.abs(out - ref_out)))

    print("KERNEL_OK")
</pallas_src>

<mosaic_0001>
module attributes {stable_mosaic.version = 11 : i64} {
  func.func @mha_kernel(%arg0: i32, %arg1: memref<2x8x32xbf16, #tpu.memory_space<vmem>>, %arg2: memref<2x8x32xbf16, #tpu.memory_space<vmem>>, %arg3: memref<2x8x32xbf16, #tpu.memory_space<vmem>>, %arg4: memref<32x32xbf16, #tpu.memory_space<vmem>>, %arg5: memref<32x32xbf16, #tpu.memory_space<vmem>>, %arg6: memref<32x32xbf16, #tpu.memory_space<vmem>>, %arg7: memref<32x32xbf16, #tpu.memory_space<vmem>>, %arg8: memref<1x32xf32, #tpu.memory_space<vmem>>, %arg9: memref<1x32xf32, #tpu.memory_space<vmem>>, %arg10: memref<2x8x32xf32, #tpu.memory_space<vmem>>, %arg11: memref<2x4x8x8xbf16, #tpu.memory_space<vmem>>) attributes {dimension_semantics = [#tpu.dimension_semantics<arbitrary>], iteration_bounds = array<i64: 1>, scalar_prefetch = 0 : i64, scratch_operands = 0 : i64, tpu.core_type = #tpu.core_type<tc>, window_params = [{pipeline_mode = #tpu.pipeline_mode<synchronous>, transform_indices = @transform_0, window_bounds = array<i64: 2, 8, 32>}, {pipeline_mode = #tpu.pipeline_mode<synchronous>, transform_indices = @transform_1, window_bounds = array<i64: 2, 8, 32>}, {pipeline_mode = #tpu.pipeline_mode<synchronous>, transform_indices = @transform_2, window_bounds = array<i64: 2, 8, 32>}, {pipeline_mode = #tpu.pipeline_mode<synchronous>, transform_indices = @transform_3, window_bounds = array<i64: 32, 32>}, {pipeline_mode = #tpu.pipeline_mode<synchronous>, transform_indices = @transform_4, window_bounds = array<i64: 32, 32>}, {pipeline_mode = #tpu.pipeline_mode<synchronous>, transform_indices = @transform_5, window_bounds = array<i64: 32, 32>}, {pipeline_mode = #tpu.pipeline_mode<synchronous>, transform_indices = @transform_6, window_bounds = array<i64: 32, 32>}, {pipeline_mode = #tpu.pipeline_mode<synchronous>, transform_indices = @transform_7, window_bounds = array<i64: 1, 32>}, {pipeline_mode = #tpu.pipeline_mode<synchronous>, transform_indices = @transform_8, window_bounds = array<i64: 1, 32>}, {pipeline_mode = #tpu.pipeline_mode<synchronous>, transform_indices = @transform_9, window_bounds = array<i64: 2, 8, 32>}, {pipeline_mode = #tpu.pipeline_mode<synchronous>, transform_indices = @transform_10, window_bounds = array<i64: 2, 4, 8, 8>}]} {
    %c0 = arith.constant 0 : index
    %c0_0 = arith.constant 0 : index
    %c0_1 = arith.constant 0 : index
    %0 = vector.load %arg1[%c0, %c0_0, %c0_1] : memref<2x8x32xbf16, #tpu.memory_space<vmem>>, vector<2x8x32xbf16>
    %1 = vector.shape_cast %0 : vector<2x8x32xbf16> to vector<16x32xbf16>
    %c0_2 = arith.constant 0 : index
    %c0_3 = arith.constant 0 : index
    %c0_4 = arith.constant 0 : index
    %2 = vector.load %arg2[%c0_2, %c0_3, %c0_4] : memref<2x8x32xbf16, #tpu.memory_space<vmem>>, vector<2x8x32xbf16>
    %3 = vector.shape_cast %2 : vector<2x8x32xbf16> to vector<16x32xbf16>
    %c0_5 = arith.constant 0 : index
    %c0_6 = arith.constant 0 : index
    %c0_7 = arith.constant 0 : index
    %4 = vector.load %arg3[%c0_5, %c0_6, %c0_7] : memref<2x8x32xbf16, #tpu.memory_space<vmem>>, vector<2x8x32xbf16>
    %5 = vector.shape_cast %4 : vector<2x8x32xbf16> to vector<16x32xbf16>
    %6 = arith.extf %1 : vector<16x32xbf16> to vector<16x32xf32>
    %c0_8 = arith.constant 0 : index
    %c0_9 = arith.constant 0 : index
    %7 = vector.load %arg4[%c0_8, %c0_9] : memref<32x32xbf16, #tpu.memory_space<vmem>>, vector<32x32xbf16>
    %cst = arith.constant dense<0.000000e+00> : vector<16x32xf32>
    %8 = tpu.matmul %1, %7, %cst {dimension_numbers = #tpu.dot_dimension_numbers<[1], [0], [0], [1], [0, 0, 1, 1], [], []>} : vector<16x32xbf16>, vector<32x32xbf16>, vector<16x32xf32> -> vector<16x32xf32>
    %c0_10 = arith.constant 0 : index
    %c0_11 = arith.constant 0 : index
    %9 = vector.load %arg5[%c0_10, %c0_11] : memref<32x32xbf16, #tpu.memory_space<vmem>>, vector<32x32xbf16>
    %cst_12 = arith.constant dense<0.000000e+00> : vector<16x32xf32>
    %10 = tpu.matmul %3, %9, %cst_12 {dimension_numbers = #tpu.dot_dimension_numbers<[1], [0], [0], [1], [0, 0, 1, 1], [], []>} : vector<16x32xbf16>, vector<32x32xbf16>, vector<16x32xf32> -> vector<16x32xf32>
    %c0_13 = arith.constant 0 : index
    %c0_14 = arith.constant 0 : index
    %11 = vector.load %arg6[%c0_13, %c0_14] : memref<32x32xbf16, #tpu.memory_space<vmem>>, vector<32x32xbf16>
    %cst_15 = arith.constant dense<0.000000e+00> : vector<16x32xf32>
    %12 = tpu.matmul %5, %11, %cst_15 {dimension_numbers = #tpu.dot_dimension_numbers<[1], [0], [0], [1], [0, 0, 1, 1], [], []>} : vector<16x32xbf16>, vector<32x32xbf16>, vector<16x32xf32> -> vector<16x32xf32>
    %13 = vector.extract_strided_slice %8 {offsets = [0, 0], sizes = [8, 32], strides = [1, 1]} : vector<16x32xf32> to vector<8x32xf32>
    %14 = vector.shape_cast %13 : vector<8x32xf32> to vector<8x4x8xf32>
    %15 = tpu.transpose %14, [1, 0, 2] : vector<8x4x8xf32> -> vector<4x8x8xf32>
    %16 = vector.extract_strided_slice %10 {offsets = [0, 0], sizes = [8, 32], strides = [1, 1]} : vector<16x32xf32> to vector<8x32xf32>
    %17 = vector.shape_cast %16 : vector<8x32xf32> to vector<8x4x8xf32>
    %18 = tpu.transpose %17, [1, 0, 2] : vector<8x4x8xf32> -> vector<4x8x8xf32>
    %19 = vector.extract_strided_slice %12 {offsets = [0, 0], sizes = [8, 32], strides = [1, 1]} : vector<16x32xf32> to vector<8x32xf32>
    %20 = vector.shape_cast %19 : vector<8x32xf32> to vector<8x4x8xf32>
    %21 = tpu.transpose %20, [1, 0, 2] : vector<8x4x8xf32> -> vector<4x8x8xf32>
    %22 = arith.truncf %15 : vector<4x8x8xf32> to vector<4x8x8xbf16>
    %23 = arith.truncf %18 : vector<4x8x8xf32> to vector<4x8x8xbf16>
    "tpu.trace_start"() <{level = 10 : i32, message = "hqd,hkd->hqk"}> : () -> ()
    %cst_16 = arith.constant dense<0.000000e+00> : vector<4x8x8xf32>
    %24 = tpu.matmul %22, %23, %cst_16 {dimension_numbers = #tpu.dot_dimension_numbers<[2], [2], [1], [1], [0, 0, 0, 1, 1, 1], [0], [0]>} : vector<4x8x8xbf16>, vector<4x8x8xbf16>, vector<4x8x8xf32> -> vector<4x8x8xf32>
    "tpu.trace_stop"() : () -> ()
    %cst_17 = arith.constant dense<0xFF800000> : vector<4x8xf32>
    %25 = vector.multi_reduction <maximumf>, %24, %cst_17 [2] : vector<4x8x8xf32> to vector<4x8xf32>
    %26 = vector.shape_cast %25 : vector<4x8xf32> to vector<4x8x1xf32>
    %27 = vector.broadcast %26 : vector<4x8x1xf32> to vector<4x8x8xf32>
    %28 = arith.subf %24, %27 : vector<4x8x8xf32>
    %29 = math.exp %28 : vector<4x8x8xf32>
    %cst_18 = arith.constant dense<0.000000e+00> : vector<4x8xf32>
    %30 = vector.multi_reduction <add>, %29, %cst_18 [2] : vector<4x8x8xf32> to vector<4x8xf32>
    %31 = vector.shape_cast %30 : vector<4x8xf32> to vector<4x8x1xf32>
    %32 = tpu.reciprocal %31 {approx = true} : vector<4x8x1xf32> -> vector<4x8x1xf32>
    %33 = vector.broadcast %32 : vector<4x8x1xf32> to vector<4x8x8xf32>
    %34 = arith.mulf %29, %33 : vector<4x8x8xf32>
    %35 = arith.truncf %34 : vector<4x8x8xf32> to vector<4x8x8xbf16>
    %c0_19 = arith.constant 0 : index
    %c0_20 = arith.constant 0 : index
    %c0_21 = arith.constant 0 : index
    %c0_22 = arith.constant 0 : index
    %36 = vector.load %arg11[%c0_19, %c0_20, %c0_21, %c0_22] : memref<2x4x8x8xbf16, #tpu.memory_space<vmem>>, vector<1x4x8x8xbf16>
    %37 = vector.shape_cast %36 : vector<1x4x8x8xbf16> to vector<4x8x8xbf16>
    %38 = vector.shape_cast %35 : vector<4x8x8xbf16> to vector<1x4x8x8xbf16>
    tpu.vector_store %arg11[%c0_19, %c0_20, %c0_21, %c0_22], %38 {strides = array<i32>} : memref<2x4x8x8xbf16, #tpu.memory_space<vmem>>, vector<1x4x8x8xbf16>,
    %39 = arith.truncf %34 : vector<4x8x8xf32> to vector<4x8x8xbf16>
    %40 = arith.truncf %21 : vector<4x8x8xf32> to vector<4x8x8xbf16>
    "tpu.trace_start"() <{level = 10 : i32, message = "hqk,hkd->hqd"}> : () -> ()
    %cst_23 = arith.constant dense<0.000000e+00> : vector<4x8x8xf32>
    %41 = tpu.matmul %39, %40, %cst_23 {dimension_numbers = #tpu.dot_dimension_numbers<[2], [1], [1], [2], [0, 0, 0, 1, 1, 2], [0], [0]>} : vector<4x8x8xbf16>, vector<4x8x8xbf16>, vector<4x8x8xf32> -> vector<4x8x8xf32>
    "tpu.trace_stop"() : () -> ()
    %42 = tpu.transpose %41, [1, 0, 2] : vector<4x8x8xf32> -> vector<8x4x8xf32>
    %43 = vector.shape_cast %42 : vector<8x4x8xf32> to vector<8x32xf32>
    %44 = vector.extract_strided_slice %8 {offsets = [8, 0], sizes = [8, 32], strides = [1, 1]} : vector<16x32xf32> to vector<8x32xf32>
    %45 = vector.shape_cast %44 : vector<8x32xf32> to vector<8x4x8xf32>
    %46 = tpu.transpose %45, [1, 0, 2] : vector<8x4x8xf32> -> vector<4x8x8xf32>
    %47 = vector.extract_strided_slice %10 {offsets = [8, 0], sizes = [8, 32], strides = [1, 1]} : vector<16x32xf32> to vector<8x32xf32>
    %48 = vector.shape_cast %47 : vector<8x32xf32> to vector<8x4x8xf32>
    %49 = tpu.transpose %48, [1, 0, 2] : vector<8x4x8xf32> -> vector<4x8x8xf32>
    %50 = vector.extract_strided_slice %12 {offsets = [8, 0], sizes = [8, 32], strides = [1, 1]} : vector<16x32xf32> to vector<8x32xf32>
    %51 = vector.shape_cast %50 : vector<8x32xf32> to vector<8x4x8xf32>
    %52 = tpu.transpose %51, [1, 0, 2] : vector<8x4x8xf32> -> vector<4x8x8xf32>
    %53 = arith.truncf %46 : vector<4x8x8xf32> to vector<4x8x8xbf16>
    %54 = arith.truncf %49 : vector<4x8x8xf32> to vector<4x8x8xbf16>
    "tpu.trace_start"() <{level = 10 : i32, message = "hqd,hkd->hqk"}> : () -> ()
    %cst_24 = arith.constant dense<0.000000e+00> : vector<4x8x8xf32>
    %55 = tpu.matmul %53, %54, %cst_24 {dimension_numbers = #tpu.dot_dimension_numbers<[2], [2], [1], [1], [0, 0, 0, 1, 1, 1], [0], [0]>} : vector<4x8x8xbf16>, vector<4x8x8xbf16>, vector<4x8x8xf32> -> vector<4x8x8xf32>
    "tpu.trace_stop"() : () -> ()
    %cst_25 = arith.constant dense<0xFF800000> : vector<4x8xf32>
    %56 = vector.multi_reduction <maximumf>, %55, %cst_25 [2] : vector<4x8x8xf32> to vector<4x8xf32>
    %57 = vector.shape_cast %56 : vector<4x8xf32> to vector<4x8x1xf32>
    %58 = vector.broadcast %57 : vector<4x8x1xf32> to vector<4x8x8xf32>
    %59 = arith.subf %55, %58 : vector<4x8x8xf32>
    %60 = math.exp %59 : vector<4x8x8xf32>
    %cst_26 = arith.constant dense<0.000000e+00> : vector<4x8xf32>
    %61 = vector.multi_reduction <add>, %60, %cst_26 [2] : vector<4x8x8xf32> to vector<4x8xf32>
    %62 = vector.shape_cast %61 : vector<4x8xf32> to vector<4x8x1xf32>
    %63 = tpu.reciprocal %62 {approx = true} : vector<4x8x1xf32> -> vector<4x8x1xf32>
    %64 = vector.broadcast %63 : vector<4x8x1xf32> to vector<4x8x8xf32>
    %65 = arith.mulf %60, %64 : vector<4x8x8xf32>
    %66 = arith.truncf %65 : vector<4x8x8xf32> to vector<4x8x8xbf16>
    %c1 = arith.constant 1 : index
    %c0_27 = arith.constant 0 : index
    %c0_28 = arith.constant 0 : index
    %c0_29 = arith.constant 0 : index
    %67 = vector.load %arg11[%c1, %c0_27, %c0_28, %c0_29] : memref<2x4x8x8xbf16, #tpu.memory_space<vmem>>, vector<1x4x8x8xbf16>
    %68 = vector.shape_cast %67 : vector<1x4x8x8xbf16> to vector<4x8x8xbf16>
    %69 = vector.shape_cast %66 : vector<4x8x8xbf16> to vector<1x4x8x8xbf16>
    tpu.vector_store %arg11[%c1, %c0_27, %c0_28, %c0_29], %69 {strides = array<i32>} : memref<2x4x8x8xbf16, #tpu.memory_space<vmem>>, vector<1x4x8x8xbf16>,
    %70 = arith.truncf %65 : vector<4x8x8xf32> to vector<4x8x8xbf16>
    %71 = arith.truncf %52 : vector<4x8x8xf32> to vector<4x8x8xbf16>
    "tpu.trace_start"() <{level = 10 : i32, message = "hqk,hkd->hqd"}> : () -> ()
    %cst_30 = arith.constant dense<0.000000e+00> : vector<4x8x8xf32>
    %72 = tpu.matmul %70, %71, %cst_30 {dimension_numbers = #tpu.dot_dimension_numbers<[2], [1], [1], [2], [0, 0, 0, 1, 1, 2], [0], [0]>} : vector<4x8x8xbf16>, vector<4x8x8xbf16>, vector<4x8x8xf32> -> vector<4x8x8xf32>
    "tpu.trace_stop"() : () -> ()
    %73 = tpu.transpose %72, [1, 0, 2] : vector<4x8x8xf32> -> vector<8x4x8xf32>
    %74 = vector.shape_cast %73 : vector<8x4x8xf32> to vector<8x32xf32>
    %75 = tpu.concatenate %43, %74 in 0 : vector<8x32xf32>, vector<8x32xf32> -> vector<16x32xf32>
    %76 = arith.truncf %75 : vector<16x32xf32> to vector<16x32xbf16>
    %c0_31 = arith.constant 0 : index
    %c0_32 = arith.constant 0 : index
    %77 = vector.load %arg7[%c0_31, %c0_32] : memref<32x32xbf16, #tpu.memory_space<vmem>>, vector<32x32xbf16>
    %cst_33 = arith.constant dense<0.000000e+00> : vector<16x32xf32>
    %78 = tpu.matmul %76, %77, %cst_33 {dimension_numbers = #tpu.dot_dimension_numbers<[1], [0], [0], [1], [0, 0, 1, 1], [], []>} : vector<16x32xbf16>, vector<32x32xbf16>, vector<16x32xf32> -> vector<16x32xf32>
    %79 = arith.addf %78, %6 : vector<16x32xf32>
    %cst_34 = arith.constant dense<0.000000e+00> : vector<16xf32>
    %80 = vector.multi_reduction <add>, %79, %cst_34 [1] : vector<16x32xf32> to vector<16xf32>
    %81 = vector.shape_cast %80 : vector<16xf32> to vector<16x1xf32>
    %cst_35 = arith.constant 3.200000e+01 : f32
    %82 = vector.broadcast %cst_35 : f32 to vector<16x1xf32>
    %83 = arith.divf %81, %82 : vector<16x1xf32>
    %84 = vector.broadcast %83 : vector<16x1xf32> to vector<16x32xf32>
    %85 = arith.subf %79, %84 : vector<16x32xf32>
    %86 = arith.mulf %85, %85 : vector<16x32xf32>
    %cst_36 = arith.constant dense<0.000000e+00> : vector<16xf32>
    %87 = vector.multi_reduction <add>, %86, %cst_36 [1] : vector<16x32xf32> to vector<16xf32>
    %88 = vector.shape_cast %87 : vector<16xf32> to vector<16x1xf32>
    %cst_37 = arith.constant 3.200000e+01 : f32
    %89 = vector.broadcast %cst_37 : f32 to vector<16x1xf32>
    %90 = arith.divf %88, %89 : vector<16x1xf32>
    %cst_38 = arith.constant 9.99999997E-7 : f32
    %91 = vector.broadcast %cst_38 : f32 to vector<16x1xf32>
    %92 = arith.addf %90, %91 : vector<16x1xf32>
    %93 = math.rsqrt %92 : vector<16x1xf32>
    %94 = vector.broadcast %93 : vector<16x1xf32> to vector<16x32xf32>
    %95 = arith.mulf %85, %94 : vector<16x32xf32>
    %c0_39 = arith.constant 0 : index
    %c0_40 = arith.constant 0 : index
    %96 = vector.load %arg8[%c0_39, %c0_40] : memref<1x32xf32, #tpu.memory_space<vmem>>, vector<1x32xf32>
    %97 = vector.broadcast %96 : vector<1x32xf32> to vector<16x32xf32>
    %98 = arith.mulf %95, %97 : vector<16x32xf32>
    %c0_41 = arith.constant 0 : index
    %c0_42 = arith.constant 0 : index
    %99 = vector.load %arg9[%c0_41, %c0_42] : memref<1x32xf32, #tpu.memory_space<vmem>>, vector<1x32xf32>
    %100 = vector.broadcast %99 : vector<1x32xf32> to vector<16x32xf32>
    %101 = arith.addf %98, %100 : vector<16x32xf32>
    %102 = vector.shape_cast %101 : vector<16x32xf32> to vector<2x8x32xf32>
    %c0_43 = arith.constant 0 : index
    %c0_44 = arith.constant 0 : index
    %c0_45 = arith.constant 0 : index
    %103 = vector.load %arg10[%c0_43, %c0_44, %c0_45] : memref<2x8x32xf32, #tpu.memory_space<vmem>>, vector<2x8x32xf32>
    tpu.vector_store %arg10[%c0_43, %c0_44, %c0_45], %102 {strides = array<i32>} : memref<2x8x32xf32, #tpu.memory_space<vmem>>, vector<2x8x32xf32>,
    return
  }
  func.func @transform_0(%arg0: i32) -> (i32, i32, i32) {
    %c0_i32 = arith.constant 0 : i32
    %c0_i32_0 = arith.constant 0 : i32
    %c0_i32_1 = arith.constant 0 : i32
    %c0_i32_2 = arith.constant 0 : i32
    return %c0_i32, %c0_i32_0, %c0_i32_1 : i32, i32, i32
  }
  func.func @transform_1(%arg0: i32) -> (i32, i32, i32) {
    %c0_i32 = arith.constant 0 : i32
    %c0_i32_0 = arith.constant 0 : i32
    %c0_i32_1 = arith.constant 0 : i32
    %c0_i32_2 = arith.constant 0 : i32
    return %c0_i32, %c0_i32_0, %c0_i32_1 : i32, i32, i32
  }
  func.func @transform_2(%arg0: i32) -> (i32, i32, i32) {
    %c0_i32 = arith.constant 0 : i32
    %c0_i32_0 = arith.constant 0 : i32
    %c0_i32_1 = arith.constant 0 : i32
    %c0_i32_2 = arith.constant 0 : i32
    return %c0_i32, %c0_i32_0, %c0_i32_1 : i32, i32, i32
  }
  func.func @transform_3(%arg0: i32) -> (i32, i32) {
    %c0_i32 = arith.constant 0 : i32
    %c0_i32_0 = arith.constant 0 : i32
    %c0_i32_1 = arith.constant 0 : i32
    return %c0_i32, %c0_i32_0 : i32, i32
  }
  func.func @transform_4(%arg0: i32) -> (i32, i32) {
    %c0_i32 = arith.constant 0 : i32
    %c0_i32_0 = arith.constant 0 : i32
    %c0_i32_1 = arith.constant 0 : i32
    return %c0_i32, %c0_i32_0 : i32, i32
  }
  func.func @transform_5(%arg0: i32) -> (i32, i32) {
    %c0_i32 = arith.constant 0 : i32
    %c0_i32_0 = arith.constant 0 : i32
    %c0_i32_1 = arith.constant 0 : i32
    return %c0_i32, %c0_i32_0 : i32, i32
  }
  func.func @transform_6(%arg0: i32) -> (i32, i32) {
    %c0_i32 = arith.constant 0 : i32
    %c0_i32_0 = arith.constant 0 : i32
    %c0_i32_1 = arith.constant 0 : i32
    return %c0_i32, %c0_i32_0 : i32, i32
  }
  func.func @transform_7(%arg0: i32) -> (i32, i32) {
    %c0_i32 = arith.constant 0 : i32
    %c0_i32_0 = arith.constant 0 : i32
    %c0_i32_1 = arith.constant 0 : i32
    return %c0_i32, %c0_i32_0 : i32, i32
  }
  func.func @transform_8(%arg0: i32) -> (i32, i32) {
    %c0_i32 = arith.constant 0 : i32
    %c0_i32_0 = arith.constant 0 : i32
    %c0_i32_1 = arith.constant 0 : i32
    return %c0_i32, %c0_i32_0 : i32, i32
  }
  func.func @transform_9(%arg0: i32) -> (i32, i32, i32) {
    %c0_i32 = arith.constant 0 : i32
    %c0_i32_0 = arith.constant 0 : i32
    %c0_i32_1 = arith.constant 0 : i32
    %c0_i32_2 = arith.constant 0 : i32
    return %c0_i32, %c0_i32_0, %c0_i32_1 : i32, i32, i32
  }
  func.func @transform_10(%arg0: i32) -> (i32, i32, i32, i32) {
    %c0_i32 = arith.constant 0 : i32
    %c0_i32_0 = arith.constant 0 : i32
    %c0_i32_1 = arith.constant 0 : i32
    %c0_i32_2 = arith.constant 0 : i32
    %c0_i32_3 = arith.constant 0 : i32
    return %c0_i32, %c0_i32_0, %c0_i32_1, %c0_i32_2 : i32, i32, i32, i32
  }
}

</mosaic_0001>

<llo_original>
// kernel: tpu_custom_call.1
$region0: #{tpu_custom_call.1}
  #allocation0 [shape = 'u32[]', space=smem, size = 0x4, offset = 0x4, fixed_abs, tag = 'smem constant byte address 0x4 - core index']
  #allocation1 [shape = 'u32[72,128]{1,0:T(1,128)}', space=vmem, size = 0x9000, scoped, tag = 'internal scratch']
  %s0 = inlined_call_operand.hbm [shape: bf16[2,8,32], index: 0, kind: input, shape index: {}]
  %s1 = inlined_call_operand.hbm [shape: bf16[2,8,32], index: 1, kind: input, shape index: {}]
  %s2 = inlined_call_operand.hbm [shape: bf16[2,8,32], index: 2, kind: input, shape index: {}]
  %s3 = inlined_call_operand.hbm [shape: bf16[32,32], index: 3, kind: input, shape index: {}]
  %s4 = inlined_call_operand.hbm [shape: bf16[32,32], index: 4, kind: input, shape index: {}]
  %s5 = inlined_call_operand.hbm [shape: bf16[32,32], index: 5, kind: input, shape index: {}]
  %s6 = inlined_call_operand.hbm [shape: bf16[32,32], index: 6, kind: input, shape index: {}]
  %s7 = inlined_call_operand.vmem [shape: f32[1,32], index: 7, kind: input, shape index: {}]
  %s8 = inlined_call_operand.vmem [shape: f32[1,32], index: 8, kind: input, shape index: {}]
  %s9 = inlined_call_operand.hbm [shape: f32[2,8,32], index: 9, kind: output, shape index: {0}]
  %s10 = inlined_call_operand.hbm [shape: bf16[2,4,8,8], index: 10, kind: output, shape index: {1}]
  %11 = xla_tuple %s9, %s10
  %s12 = sld [smem:[#allocation0]]
  $region82: #{tpu_custom_call.1} parent=0
    _
  %s14 = ssub.s32 1, %s12
  %s15 = scalar_select 0, %s14, %s12
  $region1: #{tpu_custom_call.1} parent=0
    #allocation2 [shape = 'u8[4096]{0}', space=vmem, size = 0x1000, scoped, tag = 'input window, operand 0, single buffered']
    #allocation3 [shape = 's32[1]{0}', space=sflag, size = 0x4, scoped, tag = 'scoped memory for tpu_custom_call.1']
    #allocation4 [shape = 's32[1]{0}', space=sflag, size = 0x4, scoped, tag = 'scoped memory for tpu_custom_call.1']
    #allocation5 [shape = 'u8[4096]{0}', space=vmem, size = 0x1000, scoped, tag = 'input window, operand 1, single buffered']
    #allocation6 [shape = 's32[1]{0}', space=sflag, size = 0x4, scoped, tag = 'scoped memory for tpu_custom_call.1']
    #allocation7 [shape = 'u8[4096]{0}', space=vmem, size = 0x1000, scoped, tag = 'input window, operand 2, single buffered']
    #allocation8 [shape = 'u8[8192]{0}', space=vmem, size = 0x2000, scoped, tag = 'input window, operand 3, single buffered']
    #allocation9 [shape = 's32[1]{0}', space=sflag, size = 0x4, scoped, tag = 'scoped memory for tpu_custom_call.1']
    #allocation10 [shape = 'u8[8192]{0}', space=vmem, size = 0x2000, scoped, tag = 'input window, operand 4, single buffered']
    #allocation11 [shape = 'u8[8192]{0}', space=vmem, size = 0x2000, scoped, tag = 'input window, operand 5, single buffered']
    #allocation12 [shape = 's32[1]{0}', space=sflag, size = 0x4, scoped, tag = 'scoped memory for tpu_custom_call.1']
    #allocation13 [shape = 'u8[8192]{0}', space=vmem, size = 0x2000, scoped, tag = 'input window, operand 6, single buffered']
    #allocation14 [shape = 'u8[8192]{0}', space=vmem, size = 0x2000, scoped, tag = 'output window, operand 0, single buffered']
    #allocation15 [shape = 'u8[16384]{0}', space=vmem, size = 0x4000, scoped, tag = 'output window, operand 1, single buffered']
    #allocation16 [shape = 's32[1]{0}', space=sflag, size = 0x4, scoped, tag = 'scoped memory for tpu_custom_call.1']
    %16 = vsyncpa [#allocation3], 0
    %17 = vsyncpa [#allocation6], 0
    %18 = vsyncpa [#allocation9], 0
    %19 = vsyncpa [#allocation12], 0
    %20 = vsyncpa [#allocation4], 0
    %21 = vsyncpa [#allocation16], 0
    // Predicated region
    $region2: #{tpu_custom_call.1} parent=1 // pred_check
      _
    $region3: #{tpu_custom_call.1} parent=1 // pred_check_branch
      %23 = sbr.rel (0) target = $region5
    $region4: #{tpu_custom_call.1} parent=1 // pred_region
      %25 = vsyncadd [#allocation3], 0
      %s26 = sshll.u32 %s0, 4
      %s27 = int_to_ptr.hbm [resolvable:$true] %s26
      %s28 = sshll.u32 [#allocation2], 4
      %s29 = int_to_ptr.vmem [resolvable:$true] %s28
      %34 = dma.hbm_to_vmem [thread:$0]  %s27, 128, %s29, [#allocation3], 64, 64, 4
    $region5: #{tpu_custom_call.1} parent=1 // pred_fallthru
      _
    // Predicated region
    $region6: #{tpu_custom_call.1} parent=1 // pred_check
      _
    $region7: #{tpu_custom_call.1} parent=1 // pred_check_branch
      %36 = sbr.rel (0) target = $region9
    $region8: #{tpu_custom_call.1} parent=1 // pred_region
      %38 = vsyncadd [#allocation6], 0
      %s39 = sshll.u32 %s1, 4
      %s40 = int_to_ptr.hbm [resolvable:$true] %s39
      %s41 = sshll.u32 [#allocation5], 4
      %s42 = int_to_ptr.vmem [resolvable:$true] %s41
      %47 = dma.hbm_to_vmem [thread:$0]  %s40, 128, %s42, [#allocation6], 64, 64, 4
    $region9: #{tpu_custom_call.1} parent=1 // pred_fallthru
      _
    // Predicated region
    $region10: #{tpu_custom_call.1} parent=1 // pred_check
      _
    $region11: #{tpu_custom_call.1} parent=1 // pred_check_branch
      %49 = sbr.rel (0) target = $region13
    $region12: #{tpu_custom_call.1} parent=1 // pred_region
      %51 = vsyncadd [#allocation6], 0
      %s52 = sshll.u32 %s2, 4
      %s53 = int_to_ptr.hbm [resolvable:$true] %s52
      %s54 = sshll.u32 [#allocation7], 4
      %s55 = int_to_ptr.vmem [resolvable:$true] %s54
      %60 = dma.hbm_to_vmem [thread:$0]  %s53, 128, %s55, [#allocation6], 64, 64, 4
    $region13: #{tpu_custom_call.1} parent=1 // pred_fallthru
      _
    // Predicated region
    $region14: #{tpu_custom_call.1} parent=1 // pred_check
      _
    $region15: #{tpu_custom_call.1} parent=1 // pred_check_branch
      %62 = sbr.rel (0) target = $region17
    $region16: #{tpu_custom_call.1} parent=1 // pred_region
      %64 = vsyncadd [#allocation9], 0
      %s65 = sshll.u32 %s3, 4
      %s66 = int_to_ptr.hbm [resolvable:$true] %s65
      %s67 = sshll.u32 [#allocation8], 4
      %s68 = int_to_ptr.vmem [resolvable:$true] %s67
      %73 = dma.hbm_to_vmem [thread:$0]  %s66, 256, %s68, [#allocation9], 64, 64, 4
    $region17: #{tpu_custom_call.1} parent=1 // pred_fallthru
      _
    // Predicated region
    $region18: #{tpu_custom_call.1} parent=1 // pred_check
      _
    $region19: #{tpu_custom_call.1} parent=1 // pred_check_branch
      %75 = sbr.rel (0) target = $region21
    $region20: #{tpu_custom_call.1} parent=1 // pred_region
      %77 = vsyncadd [#allocation9], 0
      %s78 = sshll.u32 %s4, 4
      %s79 = int_to_ptr.hbm [resolvable:$true] %s78
      %s80 = sshll.u32 [#allocation10], 4
      %s81 = int_to_ptr.vmem [resolvable:$true] %s80
      %86 = dma.hbm_to_vmem [thread:$0]  %s79, 256, %s81, [#allocation9], 64, 64, 4
    $region21: #{tpu_custom_call.1} parent=1 // pred_fallthru
      _
    // Predicated region
    $region22: #{tpu_custom_call.1} parent=1 // pred_check
      _
    $region23: #{tpu_custom_call.1} parent=1 // pred_check_branch
      %88 = sbr.rel (0) target = $region25
    $region24: #{tpu_custom_call.1} parent=1 // pred_region
      %90 = vsyncadd [#allocation12], 0
      %s91 = sshll.u32 %s5, 4
      %s92 = int_to_ptr.hbm [resolvable:$true] %s91
      %s93 = sshll.u32 [#allocation11], 4
      %s94 = int_to_ptr.vmem [resolvable:$true] %s93
      %99 = dma.hbm_to_vmem [thread:$0]  %s92, 256, %s94, [#allocation12], 64, 64, 4
    $region25: #{tpu_custom_call.1} parent=1 // pred_fallthru
      _
    // Predicated region
    $region26: #{tpu_custom_call.1} parent=1 // pred_check
      _
    $region27: #{tpu_custom_call.1} parent=1 // pred_check_branch
      %101 = sbr.rel (0) target = $region29
    $region28: #{tpu_custom_call.1} parent=1 // pred_region
      %103 = vsyncadd [#allocation12], 0
      %s104 = sshll.u32 %s6, 4
      %s105 = int_to_ptr.hbm [resolvable:$true] %s104
      %s106 = sshll.u32 [#allocation13], 4
      %s107 = int_to_ptr.vmem [resolvable:$true] %s106
      %112 = dma.hbm_to_vmem [thread:$0]  %s105, 256, %s107, [#allocation12], 64, 64, 4
    $region29: #{tpu_custom_call.1} parent=1 // pred_fallthru
      _
    // Predicated region
    $region30: #{tpu_custom_call.1} parent=1 // pred_check
      _
    $region31: #{tpu_custom_call.1} parent=1 // pred_check_branch
      %114 = sbr.rel (0) target = $region33
    $region32: #{tpu_custom_call.1} parent=1 // pred_region
      _
    $region33: #{tpu_custom_call.1} parent=1 // pred_fallthru
      _
    // Predicated region
    $region34: #{tpu_custom_call.1} parent=1 // pred_check
      _
    $region35: #{tpu_custom_call.1} parent=1 // pred_check_branch
      %116 = sbr.rel (0) target = $region37
    $region36: #{tpu_custom_call.1} parent=1 // pred_region
      _
    $region37: #{tpu_custom_call.1} parent=1 // pred_fallthru
      _
    // Predicated region
    $region38: #{tpu_custom_call.1} parent=1 // pred_check
      _
    $region39: #{tpu_custom_call.1} parent=1 // pred_check_branch
      %118 = sbr.rel (0) target = $region41
    $region40: #{tpu_custom_call.1} parent=1 // pred_region
      %120 = dma.done [#allocation3], 128
    $region41: #{tpu_custom_call.1} parent=1 // pred_fallthru
      _
    // Predicated region
    $region42: #{tpu_custom_call.1} parent=1 // pred_check
      _
    $region43: #{tpu_custom_call.1} parent=1 // pred_check_branch
      %122 = sbr.rel (0) target = $region45
    $region44: #{tpu_custom_call.1} parent=1 // pred_region
      %124 = dma.done [#allocation6], 128
    $region45: #{tpu_custom_call.1} parent=1 // pred_fallthru
      _
    // Predicated region
    $region46: #{tpu_custom_call.1} parent=1 // pred_check
      _
    $region47: #{tpu_custom_call.1} parent=1 // pred_check_branch
      %126 = sbr.rel (0) target = $region49
    $region48: #{tpu_custom_call.1} parent=1 // pred_region
      %128 = dma.done [#allocation6], 128
    $region49: #{tpu_custom_call.1} parent=1 // pred_fallthru
      _
    // Predicated region
    $region50: #{tpu_custom_call.1} parent=1 // pred_check
      _
    $region51: #{tpu_custom_call.1} parent=1 // pred_check_branch
      %130 = sbr.rel (0) target = $region53
    $region52: #{tpu_custom_call.1} parent=1 // pred_region
      %132 = dma.done [#allocation9], 256
    $region53: #{tpu_custom_call.1} parent=1 // pred_fallthru
      _
    // Predicated region
    $region54: #{tpu_custom_call.1} parent=1 // pred_check
      _
    $region55: #{tpu_custom_call.1} parent=1 // pred_check_branch
      %134 = sbr.rel (0) target = $region57
    $region56: #{tpu_custom_call.1} parent=1 // pred_region
      %136 = dma.done [#allocation9], 256
    $region57: #{tpu_custom_call.1} parent=1 // pred_fallthru
      _
    // Predicated region
    $region58: #{tpu_custom_call.1} parent=1 // pred_check
      _
    $region59: #{tpu_custom_call.1} parent=1 // pred_check_branch
      %138 = sbr.rel (0) target = $region61
    $region60: #{tpu_custom_call.1} parent=1 // pred_region
      %140 = dma.done [#allocation12], 256
    $region61: #{tpu_custom_call.1} parent=1 // pred_fallthru
      _
    // Predicated region
    $region62: #{tpu_custom_call.1} parent=1 // pred_check
      _
    $region63: #{tpu_custom_call.1} parent=1 // pred_check_branch
      %142 = sbr.rel (0) target = $region65
    $region64: #{tpu_custom_call.1} parent=1 // pred_region
      %144 = dma.done [#allocation12], 256
    $region65: #{tpu_custom_call.1} parent=1 // pred_fallthru
      _
    %v146 = vld [vmem:[#allocation2] sm:$0xf]
    %v147 = vld [vmem:[#allocation2 + $0x4] sm:$0xf]
    %v148 = vld [vmem:[#allocation5] sm:$0xf]
    %v149 = vld [vmem:[#allocation5 + $0x4] sm:$0xf]
    %v150 = vld [vmem:[#allocation7] sm:$0xf]
    %v151 = vld [vmem:[#allocation7 + $0x4] sm:$0xf]
    %v152 = vunpack.c.l.bf16 %v146
    %v153 = vunpack.c.l.bf16 %v147
    %v154 = vld [vmem:[#allocation8] sm:$0xf]
    %v155 = vld [vmem:[#allocation8 + $0x4] sm:$0xf]
    %v156 = vld [vmem:[#allocation8 + $0x8] sm:$0xf]
    %v157 = vld [vmem:[#allocation8 + $0xc] sm:$0xf]
    %v160 = vunpack.c.l.b16 %v146
    %v161 = vunpack.c.l.b16 %v147
    %v162 = vpack.c.b16 %v161, %v160
    %v167 = vunpack.c.l.b16 %v154
    %v168 = vunpack.c.l.b16 %v155
    %v169 = vunpack.c.l.b16 %v156
    %v170 = vunpack.c.l.b16 %v157
    %v171 = vpack.c.b16 %v168, %v167
    %v172 = vpack.c.b16 %v170, %v169
    %vm175 = vcmask 261120
    %v177 = vsel %vm175, %v162, 0
    %179 = vmatpush.bf16.msra.mxu0 0
    %180 = vmatpush.bf16.msra.mxu0 0
    %181 = vmatpush.bf16.msra.mxu0 0
    %182 = vmatpush.bf16.msra.mxu0 0
    %183 = vmatpush.bf16.msra.mxu0 0
    %184 = vmatpush.bf16.msra.mxu0 0
    %185 = vmatpush.bf16.msra.mxu0 %v172
    %186 = vmatpush.bf16.msra.mxu0 %v171
    %187 = vmatmul.bf16.gmra.mxu0 %v177
    %v188 = vpop.f32.mrf.mxu0
    %v189 = vadd.f32 0.0, %v188
    %v190 = vpop.f32.mrf.mxu0
    %v191 = vadd.f32 0.0, %v190
    %192 = vdwg.mxu0
    %v193 = vld [vmem:[#allocation10] sm:$0xf]
    %v194 = vld [vmem:[#allocation10 + $0x4] sm:$0xf]
    %v195 = vld [vmem:[#allocation10 + $0x8] sm:$0xf]
    %v196 = vld [vmem:[#allocation10 + $0xc] sm:$0xf]
    %v199 = vunpack.c.l.b16 %v148
    %v200 = vunpack.c.l.b16 %v149
    %v201 = vpack.c.b16 %v200, %v199
    %v206 = vunpack.c.l.b16 %v193
    %v207 = vunpack.c.l.b16 %v194
    %v208 = vunpack.c.l.b16 %v195
    %v209 = vunpack.c.l.b16 %v196
    %v210 = vpack.c.b16 %v207, %v206
    %v211 = vpack.c.b16 %v209, %v208
    %v215 = vsel %vm175, %v201, 0
    %217 = vmatpush.bf16.msra.mxu0 0
    %218 = vmatpush.bf16.msra.mxu0 0
    %219 = vmatpush.bf16.msra.mxu0 0
    %220 = vmatpush.bf16.msra.mxu0 0
    %221 = vmatpush.bf16.msra.mxu0 0
    %222 = vmatpush.bf16.msra.mxu0 0
    %223 = vmatpush.bf16.msra.mxu0 %v211
    %224 = vmatpush.bf16.msra.mxu0 %v210
    %225 = vmatmul.bf16.gmra.mxu0 %v215
    %v226 = vpop.f32.mrf.mxu0
    %v227 = vadd.f32 0.0, %v226
    %v228 = vpop.f32.mrf.mxu0
    %v229 = vadd.f32 0.0, %v228
    %230 = vdwg.mxu0
    %v231 = vld [vmem:[#allocation11] sm:$0xf]
    %v232 = vld [vmem:[#allocation11 + $0x4] sm:$0xf]
    %v233 = vld [vmem:[#allocation11 + $0x8] sm:$0xf]
    %v234 = vld [vmem:[#allocation11 + $0xc] sm:$0xf]
    %v237 = vunpack.c.l.b16 %v150
    %v238 = vunpack.c.l.b16 %v151
    %v239 = vpack.c.b16 %v238, %v237
    %v244 = vunpack.c.l.b16 %v231
    %v245 = vunpack.c.l.b16 %v232
    %v246 = vunpack.c.l.b16 %v233
    %v247 = vunpack.c.l.b16 %v234
    %v248 = vpack.c.b16 %v245, %v244
    %v249 = vpack.c.b16 %v247, %v246
    %v253 = vsel %vm175, %v239, 0
    %255 = vmatpush.bf16.msra.mxu0 0
    %256 = vmatpush.bf16.msra.mxu0 0
    %257 = vmatpush.bf16.msra.mxu0 0
    %258 = vmatpush.bf16.msra.mxu0 0
    %259 = vmatpush.bf16.msra.mxu0 0
    %260 = vmatpush.bf16.msra.mxu0 0
    %261 = vmatpush.bf16.msra.mxu0 %v249
    %262 = vmatpush.bf16.msra.mxu0 %v248
    %263 = vmatmul.bf16.gmra.mxu0 %v253
    %v264 = vpop.f32.mrf.mxu0
    %v265 = vadd.f32 0.0, %v264
    %v266 = vpop.f32.mrf.mxu0
    %v267 = vadd.f32 0.0, %v266
    %268 = vdwg.mxu0
    %270 = vrot.lane.b32.xlu0 %v189, 120
    %v271 = vpop.permute.xlu0 %270
    %273 = vrot.lane.b32.xlu0 %v189, 112
    %v274 = vpop.permute.xlu0 %273
    %276 = vrot.lane.b32.xlu0 %v189, 104
    %v277 = vpop.permute.xlu0 %276
    %v279 = vrot.slane %v274, 4
    %vm280 = vcmask 1047556
    %v281 = vsel %vm280, %v279, %v189
    %v282 = vrot.slane %v189, 4
    %v283 = vsel %vm280, %v274, %v282
    %v285 = vunpack.c.l.s4 1983009808
    %v286 = vunpack.c.0.s8 %v285
    %v287 = vperm.slane %v281, %v286
    %v289 = vunpack.c.l.s4 1983009808
    %v290 = vunpack.c.0.s8 %v289
    %v291 = vperm.slane %v283, %v290
    %v292 = vrot.slane %v277, 4
    %v293 = vsel %vm280, %v292, %v271
    %v294 = vrot.slane %v271, 4
    %v295 = vsel %vm280, %v277, %v294
    %v297 = vunpack.c.l.s4 1983009808
    %v298 = vunpack.c.0.s8 %v297
    %v299 = vperm.slane %v293, %v298
    %v301 = vunpack.c.l.s4 1983009808
    %v302 = vunpack.c.0.s8 %v301
    %v303 = vperm.slane %v295, %v302
    %v304 = vrot.slane %v299, 4
    %v305 = vsel %vm280, %v304, %v287
    %v306 = vrot.slane %v287, 4
    %v307 = vsel %vm280, %v299, %v306
    %v309 = vunpack.c.l.s4 1934713408
    %v310 = vunpack.c.0.s8 %v309
    %v311 = vperm.slane %v305, %v310
    %v313 = vunpack.c.l.s4 1934713408
    %v314 = vunpack.c.0.s8 %v313
    %v315 = vperm.slane %v307, %v314
    %v316 = vrot.slane %v303, 4
    %v317 = vsel %vm280, %v316, %v291
    %v318 = vrot.slane %v291, 4
    %v319 = vsel %vm280, %v303, %v318
    %v321 = vunpack.c.l.s4 1934713408
    %v322 = vunpack.c.0.s8 %v321
    %v323 = vperm.slane %v317, %v322
    %v325 = vunpack.c.l.s4 1934713408
    %v326 = vunpack.c.0.s8 %v325
    %v327 = vperm.slane %v319, %v326
    %v328 = vrot.slane %v311, 4
    %v329 = vsel %vm280, 0.0, %v328
    %v330 = vrot.slane %v315, 4
    %v331 = vsel %vm280, 0.0, %v330
    %v332 = vrot.slane %v323, 4
    %v333 = vsel %vm280, 0.0, %v332
    %v334 = vrot.slane %v327, 4
    %v335 = vsel %vm280, 0.0, %v334
    %v336 = vsel %vm280, %v330, %v311
    %v338 = vunpack.c.l.s4 1983009808
    %v339 = vunpack.c.0.s8 %v338
    %v340 = vperm.slane %v336, %v339
    %v341 = vrot.slane %v331, 4
    %v342 = vsel %vm280, %v341, %v329
    %v344 = vunpack.c.l.s4 1983009808
    %v345 = vunpack.c.0.s8 %v344
    %v346 = vperm.slane %v342, %v345
    %v347 = vsel %vm280, %v334, %v323
    %v349 = vunpack.c.l.s4 1983009808
    %v350 = vunpack.c.0.s8 %v349
    %v351 = vperm.slane %v347, %v350
    %v352 = vrot.slane %v335, 4
    %v353 = vsel %vm280, %v352, %v333
    %v355 = vunpack.c.l.s4 1983009808
    %v356 = vunpack.c.0.s8 %v355
    %v357 = vperm.slane %v353, %v356
    %v358 = vrot.slane %v346, 4
    %v359 = vsel %vm280, %v358, %v340
    %v360 = vrot.slane %v340, 4
    %v361 = vsel %vm280, %v346, %v360
    %v363 = vunpack.c.l.s4 1934713408
    %v364 = vunpack.c.0.s8 %v363
    %v365 = vperm.slane %v359, %v364
    %v367 = vunpack.c.l.s4 1934713408
    %v368 = vunpack.c.0.s8 %v367
    %v369 = vperm.slane %v361, %v368
    %v370 = vrot.slane %v357, 4
    %v371 = vsel %vm280, %v370, %v351
    %v372 = vrot.slane %v351, 4
    %v373 = vsel %vm280, %v357, %v372
    %v375 = vunpack.c.l.s4 1934713408
    %v376 = vunpack.c.0.s8 %v375
    %v377 = vperm.slane %v371, %v376
    %v379 = vunpack.c.l.s4 1934713408
    %v380 = vunpack.c.0.s8 %v379
    %v381 = vperm.slane %v373, %v380
    %v382 = vrot.slane %v377, 4
    %v383 = vsel %vm280, %v382, %v365
    %v384 = vrot.slane %v365, 4
    %v385 = vsel %vm280, %v377, %v384
    %v386 = vrot.slane %v381, 4
    %v387 = vsel %vm280, %v386, %v369
    %v388 = vrot.slane %v369, 4
    %v389 = vsel %vm280, %v381, %v388
    %391 = vrot.lane.b32.xlu0 %v227, 120
    %v392 = vpop.permute.xlu0 %391
    %394 = vrot.lane.b32.xlu0 %v227, 112
    %v395 = vpop.permute.xlu0 %394
    %397 = vrot.lane.b32.xlu0 %v227, 104
    %v398 = vpop.permute.xlu0 %397
    %v400 = vrot.slane %v395, 4
    %v401 = vsel %vm280, %v400, %v227
    %v402 = vrot.slane %v227, 4
    %v403 = vsel %vm280, %v395, %v402
    %v405 = vunpack.c.l.s4 1983009808
    %v406 = vunpack.c.0.s8 %v405
    %v407 = vperm.slane %v401, %v406
    %v409 = vunpack.c.l.s4 1983009808
    %v410 = vunpack.c.0.s8 %v409
    %v411 = vperm.slane %v403, %v410
    %v412 = vrot.slane %v398, 4
    %v413 = vsel %vm280, %v412, %v392
    %v414 = vrot.slane %v392, 4
    %v415 = vsel %vm280, %v398, %v414
    %v417 = vunpack.c.l.s4 1983009808
    %v418 = vunpack.c.0.s8 %v417
    %v419 = vperm.slane %v413, %v418
    %v421 = vunpack.c.l.s4 1983009808
    %v422 = vunpack.c.0.s8 %v421
    %v423 = vperm.slane %v415, %v422
    %v424 = vrot.slane %v419, 4
    %v425 = vsel %vm280, %v424, %v407
    %v426 = vrot.slane %v407, 4
    %v427 = vsel %vm280, %v419, %v426
    %v429 = vunpack.c.l.s4 1934713408
    %v430 = vunpack.c.0.s8 %v429
    %v431 = vperm.slane %v425, %v430
    %v433 = vunpack.c.l.s4 1934713408
    %v434 = vunpack.c.0.s8 %v433
    %v435 = vperm.slane %v427, %v434
    %v436 = vrot.slane %v423, 4
    %v437 = vsel %vm280, %v436, %v411
    %v438 = vrot.slane %v411, 4
    %v439 = vsel %vm280, %v423, %v438
    %v441 = vunpack.c.l.s4 1934713408
    %v442 = vunpack.c.0.s8 %v441
    %v443 = vperm.slane %v437, %v442
    %v445 = vunpack.c.l.s4 1934713408
    %v446 = vunpack.c.0.s8 %v445
    %v447 = vperm.slane %v439, %v446
    %v448 = vrot.slane %v431, 4
    %v449 = vsel %vm280, 0.0, %v448
    %v450 = vrot.slane %v435, 4
    %v451 = vsel %vm280, 0.0, %v450
    %v452 = vrot.slane %v443, 4
    %v453 = vsel %vm280, 0.0, %v452
    %v454 = vrot.slane %v447, 4
    %v455 = vsel %vm280, 0.0, %v454
    %v456 = vsel %vm280, %v450, %v431
    %v458 = vunpack.c.l.s4 1983009808
    %v459 = vunpack.c.0.s8 %v458
    %v460 = vperm.slane %v456, %v459
    %v461 = vrot.slane %v451, 4
    %v462 = vsel %vm280, %v461, %v449
    %v464 = vunpack.c.l.s4 1983009808
    %v465 = vunpack.c.0.s8 %v464
    %v466 = vperm.slane %v462, %v465
    %v467 = vsel %vm280, %v454, %v443
    %v469 = vunpack.c.l.s4 1983009808
    %v470 = vunpack.c.0.s8 %v469
    %v471 = vperm.slane %v467, %v470
    %v472 = vrot.slane %v455, 4
    %v473 = vsel %vm280, %v472, %v453
    %v475 = vunpack.c.l.s4 1983009808
    %v476 = vunpack.c.0.s8 %v475
    %v477 = vperm.slane %v473, %v476
    %v478 = vrot.slane %v466, 4
    %v479 = vsel %vm280, %v478, %v460
    %v480 = vrot.slane %v460, 4
    %v481 = vsel %vm280, %v466, %v480
    %v483 = vunpack.c.l.s4 1934713408
    %v484 = vunpack.c.0.s8 %v483
    %v485 = vperm.slane %v479, %v484
    %v487 = vunpack.c.l.s4 1934713408
    %v488 = vunpack.c.0.s8 %v487
    %v489 = vperm.slane %v481, %v488
    %v490 = vrot.slane %v477, 4
    %v491 = vsel %vm280, %v490, %v471
    %v492 = vrot.slane %v471, 4
    %v493 = vsel %vm280, %v477, %v492
    %v495 = vunpack.c.l.s4 1934713408
    %v496 = vunpack.c.0.s8 %v495
    %v497 = vperm.slane %v491, %v496
    %v499 = vunpack.c.l.s4 1934713408
    %v500 = vunpack.c.0.s8 %v499
    %v501 = vperm.slane %v493, %v500
    %v502 = vrot.slane %v497, 4
    %v503 = vsel %vm280, %v502, %v485
    %v504 = vrot.slane %v485, 4
    %v505 = vsel %vm280, %v497, %v504
    %v506 = vrot.slane %v501, 4
    %v507 = vsel %vm280, %v506, %v489
    %v508 = vrot.slane %v489, 4
    %v509 = vsel %vm280, %v501, %v508
    %511 = vrot.lane.b32.xlu0 %v265, 120
    %v512 = vpop.permute.xlu0 %511
    %514 = vrot.lane.b32.xlu0 %v265, 112
    %v515 = vpop.permute.xlu0 %514
    %517 = vrot.lane.b32.xlu0 %v265, 104
    %v518 = vpop.permute.xlu0 %517
    %v520 = vrot.slane %v515, 4
    %v521 = vsel %vm280, %v520, %v265
    %v522 = vrot.slane %v265, 4
    %v523 = vsel %vm280, %v515, %v522
    %v525 = vunpack.c.l.s4 1983009808
    %v526 = vunpack.c.0.s8 %v525
    %v527 = vperm.slane %v521, %v526
    %v529 = vunpack.c.l.s4 1983009808
    %v530 = vunpack.c.0.s8 %v529
    %v531 = vperm.slane %v523, %v530
    %v532 = vrot.slane %v518, 4
    %v533 = vsel %vm280, %v532, %v512
    %v534 = vrot.slane %v512, 4
    %v535 = vsel %vm280, %v518, %v534
    %v537 = vunpack.c.l.s4 1983009808
    %v538 = vunpack.c.0.s8 %v537
    %v539 = vperm.slane %v533, %v538
    %v541 = vunpack.c.l.s4 1983009808
    %v542 = vunpack.c.0.s8 %v541
    %v543 = vperm.slane %v535, %v542
    %v544 = vrot.slane %v539, 4
    %v545 = vsel %vm280, %v544, %v527
    %v546 = vrot.slane %v527, 4
    %v547 = vsel %vm280, %v539, %v546
    %v549 = vunpack.c.l.s4 1934713408
    %v550 = vunpack.c.0.s8 %v549
    %v551 = vperm.slane %v545, %v550
    %v553 = vunpack.c.l.s4 1934713408
    %v554 = vunpack.c.0.s8 %v553
    %v555 = vperm.slane %v547, %v554
    %v556 = vrot.slane %v543, 4
    %v557 = vsel %vm280, %v556, %v531
    %v558 = vrot.slane %v531, 4
    %v559 = vsel %vm280, %v543, %v558
    %v561 = vunpack.c.l.s4 1934713408
    %v562 = vunpack.c.0.s8 %v561
    %v563 = vperm.slane %v557, %v562
    %v565 = vunpack.c.l.s4 1934713408
    %v566 = vunpack.c.0.s8 %v565
    %v567 = vperm.slane %v559, %v566
    %v568 = vrot.slane %v551, 4
    %v569 = vsel %vm280, 0.0, %v568
    %v570 = vrot.slane %v555, 4
    %v571 = vsel %vm280, 0.0, %v570
    %v572 = vrot.slane %v563, 4
    %v573 = vsel %vm280, 0.0, %v572
    %v574 = vrot.slane %v567, 4
    %v575 = vsel %vm280, 0.0, %v574
    %v576 = vsel %vm280, %v570, %v551
    %v578 = vunpack.c.l.s4 1983009808
    %v579 = vunpack.c.0.s8 %v578
    %v580 = vperm.slane %v576, %v579
    %v581 = vrot.slane %v571, 4
    %v582 = vsel %vm280, %v581, %v569
    %v584 = vunpack.c.l.s4 1983009808
    %v585 = vunpack.c.0.s8 %v584
    %v586 = vperm.slane %v582, %v585
    %v587 = vsel %vm280, %v574, %v563
    %v589 = vunpack.c.l.s4 1983009808
    %v590 = vunpack.c.0.s8 %v589
    %v591 = vperm.slane %v587, %v590
    %v592 = vrot.slane %v575, 4
    %v593 = vsel %vm280, %v592, %v573
    %v595 = vunpack.c.l.s4 1983009808
    %v596 = vunpack.c.0.s8 %v595
    %v597 = vperm.slane %v593, %v596
    %v598 = vrot.slane %v586, 4
    %v599 = vsel %vm280, %v598, %v580
    %v600 = vrot.slane %v580, 4
    %v601 = vsel %vm280, %v586, %v600
    %v603 = vunpack.c.l.s4 1934713408
    %v604 = vunpack.c.0.s8 %v603
    %v605 = vperm.slane %v599, %v604
    %v607 = vunpack.c.l.s4 1934713408
    %v608 = vunpack.c.0.s8 %v607
    %v609 = vperm.slane %v601, %v608
    %v610 = vrot.slane %v597, 4
    %v611 = vsel %vm280, %v610, %v591
    %v612 = vrot.slane %v591, 4
    %v613 = vsel %vm280, %v597, %v612
    %v615 = vunpack.c.l.s4 1934713408
    %v616 = vunpack.c.0.s8 %v615
    %v617 = vperm.slane %v611, %v616
    %v619 = vunpack.c.l.s4 1934713408
    %v620 = vunpack.c.0.s8 %v619
    %v621 = vperm.slane %v613, %v620
    %v622 = vrot.slane %v617, 4
    %v623 = vsel %vm280, %v622, %v605
    %v624 = vrot.slane %v605, 4
    %v625 = vsel %vm280, %v617, %v624
    %v626 = vrot.slane %v621, 4
    %v627 = vsel %vm280, %v626, %v609
    %v628 = vrot.slane %v609, 4
    %v629 = vsel %vm280, %v621, %v628
    %v630 = vpack.c.bf16 %v383, %v383
    %v631 = vpack.c.bf16 %v385, %v385
    %v632 = vpack.c.bf16 %v387, %v387
    %v633 = vpack.c.bf16 %v389, %v389
    %v634 = vpack.c.bf16 %v503, %v503
    %v635 = vpack.c.bf16 %v505, %v505
    %v636 = vpack.c.bf16 %v507, %v507
    %v637 = vpack.c.bf16 %v509, %v509
    %vm638 = vcmask 64512
    %v640 = vsel %vm638, %v630, 0
    %v643 = vsel %vm638, %v634, 0
    %645 = vmatpush.bf16.xpose.msra.mxu0 0
    %646 = vmatpush.bf16.xpose.msra.mxu0 0
    %647 = vmatpush.bf16.xpose.msra.mxu0 0
    %648 = vmatpush.bf16.xpose.msra.mxu0 0
    %649 = vmatpush.bf16.xpose.msra.mxu0 0
    %650 = vmatpush.bf16.xpose.msra.mxu0 0
    %651 = vmatpush.bf16.xpose.msra.mxu0 0
    %652 = vmatpush.bf16.xpose.msra.mxu0 %v643
    %653 = vmatmul.bf16.gmra.mxu0 %v640
    %v654 = vpop.f32.mrf.mxu0
    %v655 = vadd.f32 0.0, %v654
    %v656 = vpop.f32.mrf.mxu0
    %657 = vdwg.mxu0
    %v659 = vsel %vm638, %v631, 0
    %v662 = vsel %vm638, %v635, 0
    %664 = vmatpush.bf16.xpose.msra.mxu0 0
    %665 = vmatpush.bf16.xpose.msra.mxu0 0
    %666 = vmatpush.bf16.xpose.msra.mxu0 0
    %667 = vmatpush.bf16.xpose.msra.mxu0 0
    %668 = vmatpush.bf16.xpose.msra.mxu0 0
    %669 = vmatpush.bf16.xpose.msra.mxu0 0
    %670 = vmatpush.bf16.xpose.msra.mxu0 0
    %671 = vmatpush.bf16.xpose.msra.mxu0 %v662
    %672 = vmatmul.bf16.gmra.mxu0 %v659
    %v673 = vpop.f32.mrf.mxu0
    %v674 = vadd.f32 0.0, %v673
    %v675 = vpop.f32.mrf.mxu0
    %676 = vdwg.mxu0
    %v678 = vsel %vm638, %v632, 0
    %v681 = vsel %vm638, %v636, 0
    %683 = vmatpush.bf16.xpose.msra.mxu0 0
    %684 = vmatpush.bf16.xpose.msra.mxu0 0
    %685 = vmatpush.bf16.xpose.msra.mxu0 0
    %686 = vmatpush.bf16.xpose.msra.mxu0 0
    %687 = vmatpush.bf16.xpose.msra.mxu0 0
    %688 = vmatpush.bf16.xpose.msra.mxu0 0
    %689 = vmatpush.bf16.xpose.msra.mxu0 0
    %690 = vmatpush.bf16.xpose.msra.mxu0 %v681
    %691 = vmatmul.bf16.gmra.mxu0 %v678
    %v692 = vpop.f32.mrf.mxu0
    %v693 = vadd.f32 0.0, %v692
    %v694 = vpop.f32.mrf.mxu0
    %695 = vdwg.mxu0
    %v697 = vsel %vm638, %v633, 0
    %v700 = vsel %vm638, %v637, 0
    %702 = vmatpush.bf16.xpose.msra.mxu0 0
    %703 = vmatpush.bf16.xpose.msra.mxu0 0
    %704 = vmatpush.bf16.xpose.msra.mxu0 0
    %705 = vmatpush.bf16.xpose.msra.mxu0 0
    %706 = vmatpush.bf16.xpose.msra.mxu0 0
    %707 = vmatpush.bf16.xpose.msra.mxu0 0
    %708 = vmatpush.bf16.xpose.msra.mxu0 0
    %709 = vmatpush.bf16.xpose.msra.mxu0 %v700
    %710 = vmatmul.bf16.gmra.mxu0 %v697
    %v711 = vpop.f32.mrf.mxu0
    %v712 = vadd.f32 0.0, %v711
    %v713 = vpop.f32.mrf.mxu0
    %714 = vdwg.mxu0
    %v715 = vsel %vm638, %v655, -inf
    %716 = vmax.xlane.f32.xlu0 %v715
    %v717 = vpop.xlane.xlu0 %716
    %v718 = vsel %vm638, %v674, -inf
    %719 = vmax.xlane.f32.xlu0 %v718
    %v720 = vpop.xlane.xlu0 %719
    %v721 = vsel %vm638, %v693, -inf
    %722 = vmax.xlane.f32.xlu0 %v721
    %v723 = vpop.xlane.xlu0 %722
    %v724 = vsel %vm638, %v712, -inf
    %725 = vmax.xlane.f32.xlu0 %v724
    %v726 = vpop.xlane.xlu0 %725
    %v727 = vsub.f32 %v655, %v717
    %v728 = vsub.f32 %v674, %v720
    %v729 = vsub.f32 %v693, %v723
    %v730 = vsub.f32 %v712, %v726
    %v731 = vmul.f32 %v727, 1.442695
    %v732 = vpow.pop %v731
    %v733 = vmul.f32 %v728, 1.442695
    %v734 = vpow.pop %v733
    %v735 = vmul.f32 %v729, 1.442695
    %v736 = vpow.pop %v735
    %v737 = vmul.f32 %v730, 1.442695
    %v738 = vpow.pop %v737
    %v739 = vsel %vm638, %v732, 0.0
    %740 = vadd.xlane.f32.xlu0 %v739
    %v741 = vpop.xlane.xlu0 %740
    %v742 = vsel %vm638, %v734, 0.0
    %743 = vadd.xlane.f32.xlu0 %v742
    %v744 = vpop.xlane.xlu0 %743
    %v745 = vsel %vm638, %v736, 0.0
    %746 = vadd.xlane.f32.xlu0 %v745
    %v747 = vpop.xlane.xlu0 %746
    %v748 = vsel %vm638, %v738, 0.0
    %749 = vadd.xlane.f32.xlu0 %v748
    %v750 = vpop.xlane.xlu0 %749
    %v751 = vrcp.pop %v741
    %v752 = vrcp.pop %v744
    %v753 = vrcp.pop %v747
    %v754 = vrcp.pop %v750
    %v755 = vmul.f32 %v732, %v751
    %v756 = vmul.f32 %v734, %v752
    %v757 = vmul.f32 %v736, %v753
    %v758 = vmul.f32 %v738, %v754
    %v759 = vpack.c.bf16 %v755, %v755
    %v760 = vpack.c.bf16 %v756, %v756
    %v761 = vpack.c.bf16 %v757, %v757
    %v762 = vpack.c.bf16 %v758, %v758
    %vm763 = vcmask 60416
    %764 = vst.msk [vmem:[#allocation15] sm:$0xf] %vm763, %v759
    %765 = vst.msk [vmem:[#allocation15 + $0x4] sm:$0xf] %vm763, %v760
    %766 = vst.msk [vmem:[#allocation15 + $0x8] sm:$0xf] %vm763, %v761
    %767 = vst.msk [vmem:[#allocation15 + $0xc] sm:$0xf] %vm763, %v762
    %v768 = vpack.c.bf16 %v623, %v623
    %v769 = vpack.c.bf16 %v625, %v625
    %v770 = vpack.c.bf16 %v627, %v627
    %v771 = vpack.c.bf16 %v629, %v629
    %v773 = vsel %vm638, %v759, 0
    %vm775 = vcmask 1043456
    %v777 = vsel %vm775, %v768, 0
    %779 = vmatpush.bf16.msra.mxu0 0
    %780 = vmatpush.bf16.msra.mxu0 0
    %781 = vmatpush.bf16.msra.mxu0 0
    %782 = vmatpush.bf16.msra.mxu0 0
    %783 = vmatpush.bf16.msra.mxu0 0
    %784 = vmatpush.bf16.msra.mxu0 0
    %785 = vmatpush.bf16.msra.mxu0 0
    %786 = vmatpush.bf16.msra.mxu0 %v777
    %787 = vmatmul.bf16.gmra.mxu0 %v773
    %v788 = vpop.f32.mrf.mxu0
    %v789 = vadd.f32 0.0, %v788
    %v790 = vpop.f32.mrf.mxu0
    %791 = vdwg.mxu0
    %v793 = vsel %vm638, %v760, 0
    %v796 = vsel %vm775, %v769, 0
    %798 = vmatpush.bf16.msra.mxu0 0
    %799 = vmatpush.bf16.msra.mxu0 0
    %800 = vmatpush.bf16.msra.mxu0 0
    %801 = vmatpush.bf16.msra.mxu0 0
    %802 = vmatpush.bf16.msra.mxu0 0
    %803 = vmatpush.bf16.msra.mxu0 0
    %804 = vmatpush.bf16.msra.mxu0 0
    %805 = vmatpush.bf16.msra.mxu0 %v796
    %806 = vmatmul.bf16.gmra.mxu0 %v793
    %v807 = vpop.f32.mrf.mxu0
    %v808 = vadd.f32 0.0, %v807
    %v809 = vpop.f32.mrf.mxu0
    %810 = vdwg.mxu0
    %v812 = vsel %vm638, %v761, 0
    %v815 = vsel %vm775, %v770, 0
    %817 = vmatpush.bf16.msra.mxu0 0
    %818 = vmatpush.bf16.msra.mxu0 0
    %819 = vmatpush.bf16.msra.mxu0 0
    %820 = vmatpush.bf16.msra.mxu0 0
    %821 = vmatpush.bf16.msra.mxu0 0
    %822 = vmatpush.bf16.msra.mxu0 0
    %823 = vmatpush.bf16.msra.mxu0 0
    %824 = vmatpush.bf16.msra.mxu0 %v815
    %825 = vmatmul.bf16.gmra.mxu0 %v812
    %v826 = vpop.f32.mrf.mxu0
    %v827 = vadd.f32 0.0, %v826
    %v828 = vpop.f32.mrf.mxu0
    %829 = vdwg.mxu0
    %v831 = vsel %vm638, %v762, 0
    %v834 = vsel %vm775, %v771, 0
    %836 = vmatpush.bf16.msra.mxu0 0
    %837 = vmatpush.bf16.msra.mxu0 0
    %838 = vmatpush.bf16.msra.mxu0 0
    %839 = vmatpush.bf16.msra.mxu0 0
    %840 = vmatpush.bf16.msra.mxu0 0
    %841 = vmatpush.bf16.msra.mxu0 0
    %842 = vmatpush.bf16.msra.mxu0 0
    %843 = vmatpush.bf16.msra.mxu0 %v834
    %844 = vmatmul.bf16.gmra.mxu0 %v831
    %v845 = vpop.f32.mrf.mxu0
    %v846 = vadd.f32 0.0, %v845
    %v847 = vpop.f32.mrf.mxu0
    %848 = vdwg.mxu0
    %v849 = vrot.slane %v827, 4
    %v850 = vsel %vm280, %v849, %v789
    %v851 = vrot.slane %v789, 4
    %v852 = vsel %vm280, %v827, %v851
    %v854 = vunpack.c.l.s4 1983009808
    %v855 = vunpack.c.0.s8 %v854
    %v856 = vperm.slane %v850, %v855
    %v858 = vunpack.c.l.s4 1983009808
    %v859 = vunpack.c.0.s8 %v858
    %v860 = vperm.slane %v852, %v859
    %v861 = vrot.slane %v846, 4
    %v862 = vsel %vm280, %v861, %v808
    %v863 = vrot.slane %v808, 4
    %v864 = vsel %vm280, %v846, %v863
    %v866 = vunpack.c.l.s4 1983009808
    %v867 = vunpack.c.0.s8 %v866
    %v868 = vperm.slane %v862, %v867
    %v870 = vunpack.c.l.s4 1983009808
    %v871 = vunpack.c.0.s8 %v870
    %v872 = vperm.slane %v864, %v871
    %v873 = vrot.slane %v868, 4
    %v874 = vsel %vm280, %v873, %v856
    %v875 = vrot.slane %v856, 4
    %v876 = vsel %vm280, %v868, %v875
    %v878 = vunpack.c.l.s4 1934713408
    %v879 = vunpack.c.0.s8 %v878
    %v880 = vperm.slane %v874, %v879
    %v882 = vunpack.c.l.s4 1934713408
    %v883 = vunpack.c.0.s8 %v882
    %v884 = vperm.slane %v876, %v883
    %v885 = vrot.slane %v872, 4
    %v886 = vsel %vm280, %v885, %v860
    %v887 = vrot.slane %v860, 4
    %v888 = vsel %vm280, %v872, %v887
    %v890 = vunpack.c.l.s4 1934713408
    %v891 = vunpack.c.0.s8 %v890
    %v892 = vperm.slane %v886, %v891
    %v894 = vunpack.c.l.s4 1934713408
    %v895 = vunpack.c.0.s8 %v894
    %v896 = vperm.slane %v888, %v895
    %v897 = vrot.slane %v880, 4
    %v898 = vsel %vm280, 0.0, %v897
    %v899 = vrot.slane %v884, 4
    %v900 = vsel %vm280, 0.0, %v899
    %v901 = vrot.slane %v892, 4
    %v902 = vsel %vm280, 0.0, %v901
    %v903 = vrot.slane %v896, 4
    %v904 = vsel %vm280, 0.0, %v903
    %v905 = vsel %vm280, %v899, %v880
    %v907 = vunpack.c.l.s4 1983009808
    %v908 = vunpack.c.0.s8 %v907
    %v909 = vperm.slane %v905, %v908
    %v910 = vrot.slane %v900, 4
    %v911 = vsel %vm280, %v910, %v898
    %v913 = vunpack.c.l.s4 1983009808
    %v914 = vunpack.c.0.s8 %v913
    %v915 = vperm.slane %v911, %v914
    %v916 = vsel %vm280, %v903, %v892
    %v918 = vunpack.c.l.s4 1983009808
    %v919 = vunpack.c.0.s8 %v918
    %v920 = vperm.slane %v916, %v919
    %v921 = vrot.slane %v904, 4
    %v922 = vsel %vm280, %v921, %v902
    %v924 = vunpack.c.l.s4 1983009808
    %v925 = vunpack.c.0.s8 %v924
    %v926 = vperm.slane %v922, %v925
    %v927 = vrot.slane %v915, 4
    %v928 = vsel %vm280, %v927, %v909
    %v929 = vrot.slane %v909, 4
    %v930 = vsel %vm280, %v915, %v929
    %v932 = vunpack.c.l.s4 1934713408
    %v933 = vunpack.c.0.s8 %v932
    %v934 = vperm.slane %v928, %v933
    %v936 = vunpack.c.l.s4 1934713408
    %v937 = vunpack.c.0.s8 %v936
    %v938 = vperm.slane %v930, %v937
    %v939 = vrot.slane %v926, 4
    %v940 = vsel %vm280, %v939, %v920
    %v941 = vrot.slane %v920, 4
    %v942 = vsel %vm280, %v926, %v941
    %v944 = vunpack.c.l.s4 1934713408
    %v945 = vunpack.c.0.s8 %v944
    %v946 = vperm.slane %v940, %v945
    %v948 = vunpack.c.l.s4 1934713408
    %v949 = vunpack.c.0.s8 %v948
    %v950 = vperm.slane %v942, %v949
    %v951 = vrot.slane %v946, 4
    %v952 = vsel %vm280, %v951, %v934
    %v953 = vrot.slane %v934, 4
    %v954 = vsel %vm280, %v946, %v953
    %v955 = vrot.slane %v950, 4
    %v956 = vsel %vm280, %v955, %v938
    %v957 = vrot.slane %v938, 4
    %v958 = vsel %vm280, %v950, %v957
    %960 = vrot.lane.b32.xlu0 %v954, 8
    %v961 = vpop.permute.xlu0 %960
    %964 = vrot.lane.b32.xlu0 %v956, 16
    %v965 = vpop.permute.xlu0 %964
    %968 = vrot.lane.b32.xlu0 %v958, 24
    %v969 = vpop.permute.xlu0 %968
    %v971 = vsel %vm638, %v952, %v961
    %vm972 = vcmask 130048
    %v973 = vsel %vm972, %v971, %v965
    %vm974 = vcmask 195584
    %v975 = vsel %vm974, %v973, %v969
    %977 = vrot.lane.b32.xlu0 %v191, 120
    %v978 = vpop.permute.xlu0 %977
    %980 = vrot.lane.b32.xlu0 %v191, 112
    %v981 = vpop.permute.xlu0 %980
    %983 = vrot.lane.b32.xlu0 %v191, 104
    %v984 = vpop.permute.xlu0 %983
    %v986 = vrot.slane %v981, 4
    %v987 = vsel %vm280, %v986, %v191
    %v988 = vrot.slane %v191, 4
    %v989 = vsel %vm280, %v981, %v988
    %v991 = vunpack.c.l.s4 1983009808
    %v992 = vunpack.c.0.s8 %v991
    %v993 = vperm.slane %v987, %v992
    %v995 = vunpack.c.l.s4 1983009808
    %v996 = vunpack.c.0.s8 %v995
    %v997 = vperm.slane %v989, %v996
    %v998 = vrot.slane %v984, 4
    %v999 = vsel %vm280, %v998, %v978
    %v1000 = vrot.slane %v978, 4
    %v1001 = vsel %vm280, %v984, %v1000
    %v1003 = vunpack.c.l.s4 1983009808
    %v1004 = vunpack.c.0.s8 %v1003
    %v1005 = vperm.slane %v999, %v1004
    %v1007 = vunpack.c.l.s4 1983009808
    %v1008 = vunpack.c.0.s8 %v1007
    %v1009 = vperm.slane %v1001, %v1008
    %v1010 = vrot.slane %v1005, 4
    %v1011 = vsel %vm280, %v1010, %v993
    %v1012 = vrot.slane %v993, 4
    %v1013 = vsel %vm280, %v1005, %v1012
    %v1015 = vunpack.c.l.s4 1934713408
    %v1016 = vunpack.c.0.s8 %v1015
    %v1017 = vperm.slane %v1011, %v1016
    %v1019 = vunpack.c.l.s4 1934713408
    %v1020 = vunpack.c.0.s8 %v1019
    %v1021 = vperm.slane %v1013, %v1020
    %v1022 = vrot.slane %v1009, 4
    %v1023 = vsel %vm280, %v1022, %v997
    %v1024 = vrot.slane %v997, 4
    %v1025 = vsel %vm280, %v1009, %v1024
    %v1027 = vunpack.c.l.s4 1934713408
    %v1028 = vunpack.c.0.s8 %v1027
    %v1029 = vperm.slane %v1023, %v1028
    %v1031 = vunpack.c.l.s4 1934713408
    %v1032 = vunpack.c.0.s8 %v1031
    %v1033 = vperm.slane %v1025, %v1032
    %v1034 = vrot.slane %v1017, 4
    %v1035 = vsel %vm280, 0.0, %v1034
    %v1036 = vrot.slane %v1021, 4
    %v1037 = vsel %vm280, 0.0, %v1036
    %v1038 = vrot.slane %v1029, 4
    %v1039 = vsel %vm280, 0.0, %v1038
    %v1040 = vrot.slane %v1033, 4
    %v1041 = vsel %vm280, 0.0, %v1040
    %v1042 = vsel %vm280, %v1036, %v1017
    %v1044 = vunpack.c.l.s4 1983009808
    %v1045 = vunpack.c.0.s8 %v1044
    %v1046 = vperm.slane %v1042, %v1045
    %v1047 = vrot.slane %v1037, 4
    %v1048 = vsel %vm280, %v1047, %v1035
    %v1050 = vunpack.c.l.s4 1983009808
    %v1051 = vunpack.c.0.s8 %v1050
    %v1052 = vperm.slane %v1048, %v1051
    %v1053 = vsel %vm280, %v1040, %v1029
    %v1055 = vunpack.c.l.s4 1983009808
    %v1056 = vunpack.c.0.s8 %v1055
    %v1057 = vperm.slane %v1053, %v1056
    %v1058 = vrot.slane %v1041, 4
    %v1059 = vsel %vm280, %v1058, %v1039
    %v1061 = vunpack.c.l.s4 1983009808
    %v1062 = vunpack.c.0.s8 %v1061
    %v1063 = vperm.slane %v1059, %v1062
    %v1064 = vrot.slane %v1052, 4
    %v1065 = vsel %vm280, %v1064, %v1046
    %v1066 = vrot.slane %v1046, 4
    %v1067 = vsel %vm280, %v1052, %v1066
    %v1069 = vunpack.c.l.s4 1934713408
    %v1070 = vunpack.c.0.s8 %v1069
    %v1071 = vperm.slane %v1065, %v1070
    %v1073 = vunpack.c.l.s4 1934713408
    %v1074 = vunpack.c.0.s8 %v1073
    %v1075 = vperm.slane %v1067, %v1074
    %v1076 = vrot.slane %v1063, 4
    %v1077 = vsel %vm280, %v1076, %v1057
    %v1078 = vrot.slane %v1057, 4
    %v1079 = vsel %vm280, %v1063, %v1078
    %v1081 = vunpack.c.l.s4 1934713408
    %v1082 = vunpack.c.0.s8 %v1081
    %v1083 = vperm.slane %v1077, %v1082
    %v1085 = vunpack.c.l.s4 1934713408
    %v1086 = vunpack.c.0.s8 %v1085
    %v1087 = vperm.slane %v1079, %v1086
    %v1088 = vrot.slane %v1083, 4
    %v1089 = vsel %vm280, %v1088, %v1071
    %v1090 = vrot.slane %v1071, 4
    %v1091 = vsel %vm280, %v1083, %v1090
    %v1092 = vrot.slane %v1087, 4
    %v1093 = vsel %vm280, %v1092, %v1075
    %v1094 = vrot.slane %v1075, 4
    %v1095 = vsel %vm280, %v1087, %v1094
    %1097 = vrot.lane.b32.xlu0 %v229, 120
    %v1098 = vpop.permute.xlu0 %1097
    %1100 = vrot.lane.b32.xlu0 %v229, 112
    %v1101 = vpop.permute.xlu0 %1100
    %1103 = vrot.lane.b32.xlu0 %v229, 104
    %v1104 = vpop.permute.xlu0 %1103
    %v1106 = vrot.slane %v1101, 4
    %v1107 = vsel %vm280, %v1106, %v229
    %v1108 = vrot.slane %v229, 4
    %v1109 = vsel %vm280, %v1101, %v1108
    %v1111 = vunpack.c.l.s4 1983009808
    %v1112 = vunpack.c.0.s8 %v1111
    %v1113 = vperm.slane %v1107, %v1112
    %v1115 = vunpack.c.l.s4 1983009808
    %v1116 = vunpack.c.0.s8 %v1115
    %v1117 = vperm.slane %v1109, %v1116
    %v1118 = vrot.slane %v1104, 4
    %v1119 = vsel %vm280, %v1118, %v1098
    %v1120 = vrot.slane %v1098, 4
    %v1121 = vsel %vm280, %v1104, %v1120
    %v1123 = vunpack.c.l.s4 1983009808
    %v1124 = vunpack.c.0.s8 %v1123
    %v1125 = vperm.slane %v1119, %v1124
    %v1127 = vunpack.c.l.s4 1983009808
    %v1128 = vunpack.c.0.s8 %v1127
    %v1129 = vperm.slane %v1121, %v1128
    %v1130 = vrot.slane %v1125, 4
    %v1131 = vsel %vm280, %v1130, %v1113
    %v1132 = vrot.slane %v1113, 4
    %v1133 = vsel %vm280, %v1125, %v1132
    %v1135 = vunpack.c.l.s4 1934713408
    %v1136 = vunpack.c.0.s8 %v1135
    %v1137 = vperm.slane %v1131, %v1136
    %v1139 = vunpack.c.l.s4 1934713408
    %v1140 = vunpack.c.0.s8 %v1139
    %v1141 = vperm.slane %v1133, %v1140
    %v1142 = vrot.slane %v1129, 4
    %v1143 = vsel %vm280, %v1142, %v1117
    %v1144 = vrot.slane %v1117, 4
    %v1145 = vsel %vm280, %v1129, %v1144
    %v1147 = vunpack.c.l.s4 1934713408
    %v1148 = vunpack.c.0.s8 %v1147
    %v1149 = vperm.slane %v1143, %v1148
    %v1151 = vunpack.c.l.s4 1934713408
    %v1152 = vunpack.c.0.s8 %v1151
    %v1153 = vperm.slane %v1145, %v1152
    %v1154 = vrot.slane %v1137, 4
    %v1155 = vsel %vm280, 0.0, %v1154
    %v1156 = vrot.slane %v1141, 4
    %v1157 = vsel %vm280, 0.0, %v1156
    %v1158 = vrot.slane %v1149, 4
    %v1159 = vsel %vm280, 0.0, %v1158
    %v1160 = vrot.slane %v1153, 4
    %v1161 = vsel %vm280, 0.0, %v1160
    %v1162 = vsel %vm280, %v1156, %v1137
    %v1164 = vunpack.c.l.s4 1983009808
    %v1165 = vunpack.c.0.s8 %v1164
    %v1166 = vperm.slane %v1162, %v1165
    %v1167 = vrot.slane %v1157, 4
    %v1168 = vsel %vm280, %v1167, %v1155
    %v1170 = vunpack.c.l.s4 1983009808
    %v1171 = vunpack.c.0.s8 %v1170
    %v1172 = vperm.slane %v1168, %v1171
    %v1173 = vsel %vm280, %v1160, %v1149
    %v1175 = vunpack.c.l.s4 1983009808
    %v1176 = vunpack.c.0.s8 %v1175
    %v1177 = vperm.slane %v1173, %v1176
    %v1178 = vrot.slane %v1161, 4
    %v1179 = vsel %vm280, %v1178, %v1159
    %v1181 = vunpack.c.l.s4 1983009808
    %v1182 = vunpack.c.0.s8 %v1181
    %v1183 = vperm.slane %v1179, %v1182
    %v1184 = vrot.slane %v1172, 4
    %v1185 = vsel %vm280, %v1184, %v1166
    %v1186 = vrot.slane %v1166, 4
    %v1187 = vsel %vm280, %v1172, %v1186
    %v1189 = vunpack.c.l.s4 1934713408
    %v1190 = vunpack.c.0.s8 %v1189
    %v1191 = vperm.slane %v1185, %v1190
    %v1193 = vunpack.c.l.s4 1934713408
    %v1194 = vunpack.c.0.s8 %v1193
    %v1195 = vperm.slane %v1187, %v1194
    %v1196 = vrot.slane %v1183, 4
    %v1197 = vsel %vm280, %v1196, %v1177
    %v1198 = vrot.slane %v1177, 4
    %v1199 = vsel %vm280, %v1183, %v1198
    %v1201 = vunpack.c.l.s4 1934713408
    %v1202 = vunpack.c.0.s8 %v1201
    %v1203 = vperm.slane %v1197, %v1202
    %v1205 = vunpack.c.l.s4 1934713408
    %v1206 = vunpack.c.0.s8 %v1205
    %v1207 = vperm.slane %v1199, %v1206
    %v1208 = vrot.slane %v1203, 4
    %v1209 = vsel %vm280, %v1208, %v1191
    %v1210 = vrot.slane %v1191, 4
    %v1211 = vsel %vm280, %v1203, %v1210
    %v1212 = vrot.slane %v1207, 4
    %v1213 = vsel %vm280, %v1212, %v1195
    %v1214 = vrot.slane %v1195, 4
    %v1215 = vsel %vm280, %v1207, %v1214
    %1217 = vrot.lane.b32.xlu0 %v267, 120
    %v1218 = vpop.permute.xlu0 %1217
    %1220 = vrot.lane.b32.xlu0 %v267, 112
    %v1221 = vpop.permute.xlu0 %1220
    %1223 = vrot.lane.b32.xlu0 %v267, 104
    %v1224 = vpop.permute.xlu0 %1223
    %v1226 = vrot.slane %v1221, 4
    %v1227 = vsel %vm280, %v1226, %v267
    %v1228 = vrot.slane %v267, 4
    %v1229 = vsel %vm280, %v1221, %v1228
    %v1231 = vunpack.c.l.s4 1983009808
    %v1232 = vunpack.c.0.s8 %v1231
    %v1233 = vperm.slane %v1227, %v1232
    %v1235 = vunpack.c.l.s4 1983009808
    %v1236 = vunpack.c.0.s8 %v1235
    %v1237 = vperm.slane %v1229, %v1236
    %v1238 = vrot.slane %v1224, 4
    %v1239 = vsel %vm280, %v1238, %v1218
    %v1240 = vrot.slane %v1218, 4
    %v1241 = vsel %vm280, %v1224, %v1240
    %v1243 = vunpack.c.l.s4 1983009808
    %v1244 = vunpack.c.0.s8 %v1243
    %v1245 = vperm.slane %v1239, %v1244
    %v1247 = vunpack.c.l.s4 1983009808
    %v1248 = vunpack.c.0.s8 %v1247
    %v1249 = vperm.slane %v1241, %v1248
    %v1250 = vrot.slane %v1245, 4
    %v1251 = vsel %vm280, %v1250, %v1233
    %v1252 = vrot.slane %v1233, 4
    %v1253 = vsel %vm280, %v1245, %v1252
    %v1255 = vunpack.c.l.s4 1934713408
    %v1256 = vunpack.c.0.s8 %v1255
    %v1257 = vperm.slane %v1251, %v1256
    %v1259 = vunpack.c.l.s4 1934713408
    %v1260 = vunpack.c.0.s8 %v1259
    %v1261 = vperm.slane %v1253, %v1260
    %v1262 = vrot.slane %v1249, 4
    %v1263 = vsel %vm280, %v1262, %v1237
    %v1264 = vrot.slane %v1237, 4
    %v1265 = vsel %vm280, %v1249, %v1264
    %v1267 = vunpack.c.l.s4 1934713408
    %v1268 = vunpack.c.0.s8 %v1267
    %v1269 = vperm.slane %v1263, %v1268
    %v1271 = vunpack.c.l.s4 1934713408
    %v1272 = vunpack.c.0.s8 %v1271
    %v1273 = vperm.slane %v1265, %v1272
    %v1274 = vrot.slane %v1257, 4
    %v1275 = vsel %vm280, 0.0, %v1274
    %v1276 = vrot.slane %v1261, 4
    %v1277 = vsel %vm280, 0.0, %v1276
    %v1278 = vrot.slane %v1269, 4
    %v1279 = vsel %vm280, 0.0, %v1278
    %v1280 = vrot.slane %v1273, 4
    %v1281 = vsel %vm280, 0.0, %v1280
    %v1282 = vsel %vm280, %v1276, %v1257
    %v1284 = vunpack.c.l.s4 1983009808
    %v1285 = vunpack.c.0.s8 %v1284
    %v1286 = vperm.slane %v1282, %v1285
    %v1287 = vrot.slane %v1277, 4
    %v1288 = vsel %vm280, %v1287, %v1275
    %v1290 = vunpack.c.l.s4 1983009808
    %v1291 = vunpack.c.0.s8 %v1290
    %v1292 = vperm.slane %v1288, %v1291
    %v1293 = vsel %vm280, %v1280, %v1269
    %v1295 = vunpack.c.l.s4 1983009808
    %v1296 = vunpack.c.0.s8 %v1295
    %v1297 = vperm.slane %v1293, %v1296
    %v1298 = vrot.slane %v1281, 4
    %v1299 = vsel %vm280, %v1298, %v1279
    %v1301 = vunpack.c.l.s4 1983009808
    %v1302 = vunpack.c.0.s8 %v1301
    %v1303 = vperm.slane %v1299, %v1302
    %v1304 = vrot.slane %v1292, 4
    %v1305 = vsel %vm280, %v1304, %v1286
    %v1306 = vrot.slane %v1286, 4
    %v1307 = vsel %vm280, %v1292, %v1306
    %v1309 = vunpack.c.l.s4 1934713408
    %v1310 = vunpack.c.0.s8 %v1309
    %v1311 = vperm.slane %v1305, %v1310
    %v1313 = vunpack.c.l.s4 1934713408
    %v1314 = vunpack.c.0.s8 %v1313
    %v1315 = vperm.slane %v1307, %v1314
    %v1316 = vrot.slane %v1303, 4
    %v1317 = vsel %vm280, %v1316, %v1297
    %v1318 = vrot.slane %v1297, 4
    %v1319 = vsel %vm280, %v1303, %v1318
    %v1321 = vunpack.c.l.s4 1934713408
    %v1322 = vunpack.c.0.s8 %v1321
    %v1323 = vperm.slane %v1317, %v1322
    %v1325 = vunpack.c.l.s4 1934713408
    %v1326 = vunpack.c.0.s8 %v1325
    %v1327 = vperm.slane %v1319, %v1326
    %v1328 = vrot.slane %v1323, 4
    %v1329 = vsel %vm280, %v1328, %v1311
    %v1330 = vrot.slane %v1311, 4
    %v1331 = vsel %vm280, %v1323, %v1330
    %v1332 = vrot.slane %v1327, 4
    %v1333 = vsel %vm280, %v1332, %v1315
    %v1334 = vrot.slane %v1315, 4
    %v1335 = vsel %vm280, %v1327, %v1334
    %v1336 = vpack.c.bf16 %v1089, %v1089
    %v1337 = vpack.c.bf16 %v1091, %v1091
    %v1338 = vpack.c.bf16 %v1093, %v1093
    %v1339 = vpack.c.bf16 %v1095, %v1095
    %v1340 = vpack.c.bf16 %v1209, %v1209
    %v1341 = vpack.c.bf16 %v1211, %v1211
    %v1342 = vpack.c.bf16 %v1213, %v1213
    %v1343 = vpack.c.bf16 %v1215, %v1215
    %v1345 = vsel %vm638, %v1336, 0
    %v1348 = vsel %vm638, %v1340, 0
    %1350 = vmatpush.bf16.xpose.msra.mxu0 0
    %1351 = vmatpush.bf16.xpose.msra.mxu0 0
    %1352 = vmatpush.bf16.xpose.msra.mxu0 0
    %1353 = vmatpush.bf16.xpose.msra.mxu0 0
    %1354 = vmatpush.bf16.xpose.msra.mxu0 0
    %1355 = vmatpush.bf16.xpose.msra.mxu0 0
    %1356 = vmatpush.bf16.xpose.msra.mxu0 0
    %1357 = vmatpush.bf16.xpose.msra.mxu0 %v1348
    %1358 = vmatmul.bf16.gmra.mxu0 %v1345
    %v1359 = vpop.f32.mrf.mxu0
    %v1360 = vadd.f32 0.0, %v1359
    %v1361 = vpop.f32.mrf.mxu0
    %1362 = vdwg.mxu0
    %v1364 = vsel %vm638, %v1337, 0
    %v1367 = vsel %vm638, %v1341, 0
    %1369 = vmatpush.bf16.xpose.msra.mxu0 0
    %1370 = vmatpush.bf16.xpose.msra.mxu0 0
    %1371 = vmatpush.bf16.xpose.msra.mxu0 0
    %1372 = vmatpush.bf16.xpose.msra.mxu0 0
    %1373 = vmatpush.bf16.xpose.msra.mxu0 0
    %1374 = vmatpush.bf16.xpose.msra.mxu0 0
    %1375 = vmatpush.bf16.xpose.msra.mxu0 0
    %1376 = vmatpush.bf16.xpose.msra.mxu0 %v1367
    %1377 = vmatmul.bf16.gmra.mxu0 %v1364
    %v1378 = vpop.f32.mrf.mxu0
    %v1379 = vadd.f32 0.0, %v1378
    %v1380 = vpop.f32.mrf.mxu0
    %1381 = vdwg.mxu0
    %v1383 = vsel %vm638, %v1338, 0
    %v1386 = vsel %vm638, %v1342, 0
    %1388 = vmatpush.bf16.xpose.msra.mxu0 0
    %1389 = vmatpush.bf16.xpose.msra.mxu0 0
    %1390 = vmatpush.bf16.xpose.msra.mxu0 0
    %1391 = vmatpush.bf16.xpose.msra.mxu0 0
    %1392 = vmatpush.bf16.xpose.msra.mxu0 0
    %1393 = vmatpush.bf16.xpose.msra.mxu0 0
    %1394 = vmatpush.bf16.xpose.msra.mxu0 0
    %1395 = vmatpush.bf16.xpose.msra.mxu0 %v1386
    %1396 = vmatmul.bf16.gmra.mxu0 %v1383
    %v1397 = vpop.f32.mrf.mxu0
    %v1398 = vadd.f32 0.0, %v1397
    %v1399 = vpop.f32.mrf.mxu0
    %1400 = vdwg.mxu0
    %v1402 = vsel %vm638, %v1339, 0
    %v1405 = vsel %vm638, %v1343, 0
    %1407 = vmatpush.bf16.xpose.msra.mxu0 0
    %1408 = vmatpush.bf16.xpose.msra.mxu0 0
    %1409 = vmatpush.bf16.xpose.msra.mxu0 0
    %1410 = vmatpush.bf16.xpose.msra.mxu0 0
    %1411 = vmatpush.bf16.xpose.msra.mxu0 0
    %1412 = vmatpush.bf16.xpose.msra.mxu0 0
    %1413 = vmatpush.bf16.xpose.msra.mxu0 0
    %1414 = vmatpush.bf16.xpose.msra.mxu0 %v1405
    %1415 = vmatmul.bf16.gmra.mxu0 %v1402
    %v1416 = vpop.f32.mrf.mxu0
    %v1417 = vadd.f32 0.0, %v1416
    %v1418 = vpop.f32.mrf.mxu0
    %1419 = vdwg.mxu0
    %v1420 = vsel %vm638, %v1360, -inf
    %1421 = vmax.xlane.f32.xlu0 %v1420
    %v1422 = vpop.xlane.xlu0 %1421
    %v1423 = vsel %vm638, %v1379, -inf
    %1424 = vmax.xlane.f32.xlu0 %v1423
    %v1425 = vpop.xlane.xlu0 %1424
    %v1426 = vsel %vm638, %v1398, -inf
    %1427 = vmax.xlane.f32.xlu0 %v1426
    %v1428 = vpop.xlane.xlu0 %1427
    %v1429 = vsel %vm638, %v1417, -inf
    %1430 = vmax.xlane.f32.xlu0 %v1429
    %v1431 = vpop.xlane.xlu0 %1430
    %v1432 = vsub.f32 %v1360, %v1422
    %v1433 = vsub.f32 %v1379, %v1425
    %v1434 = vsub.f32 %v1398, %v1428
    %v1435 = vsub.f32 %v1417, %v1431
    %v1436 = vmul.f32 %v1432, 1.442695
    %v1437 = vpow.pop %v1436
    %v1438 = vmul.f32 %v1433, 1.442695
    %v1439 = vpow.pop %v1438
    %v1440 = vmul.f32 %v1434, 1.442695
    %v1441 = vpow.pop %v1440
    %v1442 = vmul.f32 %v1435, 1.442695
    %v1443 = vpow.pop %v1442
    %v1444 = vsel %vm638, %v1437, 0.0
    %1445 = vadd.xlane.f32.xlu0 %v1444
    %v1446 = vpop.xlane.xlu0 %1445
    %v1447 = vsel %vm638, %v1439, 0.0
    %1448 = vadd.xlane.f32.xlu0 %v1447
    %v1449 = vpop.xlane.xlu0 %1448
    %v1450 = vsel %vm638, %v1441, 0.0
    %1451 = vadd.xlane.f32.xlu0 %v1450
    %v1452 = vpop.xlane.xlu0 %1451
    %v1453 = vsel %vm638, %v1443, 0.0
    %1454 = vadd.xlane.f32.xlu0 %v1453
    %v1455 = vpop.xlane.xlu0 %1454
    %v1456 = vrcp.pop %v1446
    %v1457 = vrcp.pop %v1449
    %v1458 = vrcp.pop %v1452
    %v1459 = vrcp.pop %v1455
    %v1460 = vmul.f32 %v1437, %v1456
    %v1461 = vmul.f32 %v1439, %v1457
    %v1462 = vmul.f32 %v1441, %v1458
    %v1463 = vmul.f32 %v1443, %v1459
    %v1464 = vpack.c.bf16 %v1460, %v1460
    %v1465 = vpack.c.bf16 %v1461, %v1461
    %v1466 = vpack.c.bf16 %v1462, %v1462
    %v1467 = vpack.c.bf16 %v1463, %v1463
    %s1468 = scalar_lea.vmem [#allocation15], 16
    %1469 = vst.msk [vmem:[%s1468] sm:$0xf] %vm763, %v1464
    %1470 = vst.msk [vmem:[%s1468 + $0x4] sm:$0xf] %vm763, %v1465
    %1471 = vst.msk [vmem:[%s1468 + $0x8] sm:$0xf] %vm763, %v1466
    %1472 = vst.msk [vmem:[%s1468 + $0xc] sm:$0xf] %vm763, %v1467
    %v1473 = vpack.c.bf16 %v1329, %v1329
    %v1474 = vpack.c.bf16 %v1331, %v1331
    %v1475 = vpack.c.bf16 %v1333, %v1333
    %v1476 = vpack.c.bf16 %v1335, %v1335
    %v1478 = vsel %vm638, %v1464, 0
    %v1481 = vsel %vm775, %v1473, 0
    %1483 = vmatpush.bf16.msra.mxu0 0
    %1484 = vmatpush.bf16.msra.mxu0 0
    %1485 = vmatpush.bf16.msra.mxu0 0
    %1486 = vmatpush.bf16.msra.mxu0 0
    %1487 = vmatpush.bf16.msra.mxu0 0
    %1488 = vmatpush.bf16.msra.mxu0 0
    %1489 = vmatpush.bf16.msra.mxu0 0
    %1490 = vmatpush.bf16.msra.mxu0 %v1481
    %1491 = vmatmul.bf16.gmra.mxu0 %v1478
    %v1492 = vpop.f32.mrf.mxu0
    %v1493 = vadd.f32 0.0, %v1492
    %v1494 = vpop.f32.mrf.mxu0
    %1495 = vdwg.mxu0
    %v1497 = vsel %vm638, %v1465, 0
    %v1500 = vsel %vm775, %v1474, 0
    %1502 = vmatpush.bf16.msra.mxu0 0
    %1503 = vmatpush.bf16.msra.mxu0 0
    %1504 = vmatpush.bf16.msra.mxu0 0
    %1505 = vmatpush.bf16.msra.mxu0 0
    %1506 = vmatpush.bf16.msra.mxu0 0
    %1507 = vmatpush.bf16.msra.mxu0 0
    %1508 = vmatpush.bf16.msra.mxu0 0
    %1509 = vmatpush.bf16.msra.mxu0 %v1500
    %1510 = vmatmul.bf16.gmra.mxu0 %v1497
    %v1511 = vpop.f32.mrf.mxu0
    %v1512 = vadd.f32 0.0, %v1511
    %v1513 = vpop.f32.mrf.mxu0
    %1514 = vdwg.mxu0
    %v1516 = vsel %vm638, %v1466, 0
    %v1519 = vsel %vm775, %v1475, 0
    %1521 = vmatpush.bf16.msra.mxu0 0
    %1522 = vmatpush.bf16.msra.mxu0 0
    %1523 = vmatpush.bf16.msra.mxu0 0
    %1524 = vmatpush.bf16.msra.mxu0 0
    %1525 = vmatpush.bf16.msra.mxu0 0
    %1526 = vmatpush.bf16.msra.mxu0 0
    %1527 = vmatpush.bf16.msra.mxu0 0
    %1528 = vmatpush.bf16.msra.mxu0 %v1519
    %1529 = vmatmul.bf16.gmra.mxu0 %v1516
    %v1530 = vpop.f32.mrf.mxu0
    %v1531 = vadd.f32 0.0, %v1530
    %v1532 = vpop.f32.mrf.mxu0
    %1533 = vdwg.mxu0
    %v1535 = vsel %vm638, %v1467, 0
    %v1538 = vsel %vm775, %v1476, 0
    %1540 = vmatpush.bf16.msra.mxu0 0
    %1541 = vmatpush.bf16.msra.mxu0 0
    %1542 = vmatpush.bf16.msra.mxu0 0
    %1543 = vmatpush.bf16.msra.mxu0 0
    %1544 = vmatpush.bf16.msra.mxu0 0
    %1545 = vmatpush.bf16.msra.mxu0 0
    %1546 = vmatpush.bf16.msra.mxu0 0
    %1547 = vmatpush.bf16.msra.mxu0 %v1538
    %1548 = vmatmul.bf16.gmra.mxu0 %v1535
    %v1549 = vpop.f32.mrf.mxu0
    %v1550 = vadd.f32 0.0, %v1549
    %v1551 = vpop.f32.mrf.mxu0
    %1552 = vdwg.mxu0
    %v1553 = vrot.slane %v1531, 4
    %v1554 = vsel %vm280, %v1553, %v1493
    %v1555 = vrot.slane %v1493, 4
    %v1556 = vsel %vm280, %v1531, %v1555
    %v1558 = vunpack.c.l.s4 1983009808
    %v1559 = vunpack.c.0.s8 %v1558
    %v1560 = vperm.slane %v1554, %v1559
    %v1562 = vunpack.c.l.s4 1983009808
    %v1563 = vunpack.c.0.s8 %v1562
    %v1564 = vperm.slane %v1556, %v1563
    %v1565 = vrot.slane %v1550, 4
    %v1566 = vsel %vm280, %v1565, %v1512
    %v1567 = vrot.slane %v1512, 4
    %v1568 = vsel %vm280, %v1550, %v1567
    %v1570 = vunpack.c.l.s4 1983009808
    %v1571 = vunpack.c.0.s8 %v1570
    %v1572 = vperm.slane %v1566, %v1571
    %v1574 = vunpack.c.l.s4 1983009808
    %v1575 = vunpack.c.0.s8 %v1574
    %v1576 = vperm.slane %v1568, %v1575
    %v1577 = vrot.slane %v1572, 4
    %v1578 = vsel %vm280, %v1577, %v1560
    %v1579 = vrot.slane %v1560, 4
    %v1580 = vsel %vm280, %v1572, %v1579
    %v1582 = vunpack.c.l.s4 1934713408
    %v1583 = vunpack.c.0.s8 %v1582
    %v1584 = vperm.slane %v1578, %v1583
    %v1586 = vunpack.c.l.s4 1934713408
    %v1587 = vunpack.c.0.s8 %v1586
    %v1588 = vperm.slane %v1580, %v1587
    %v1589 = vrot.slane %v1576, 4
    %v1590 = vsel %vm280, %v1589, %v1564
    %v1591 = vrot.slane %v1564, 4
    %v1592 = vsel %vm280, %v1576, %v1591
    %v1594 = vunpack.c.l.s4 1934713408
    %v1595 = vunpack.c.0.s8 %v1594
    %v1596 = vperm.slane %v1590, %v1595
    %v1598 = vunpack.c.l.s4 1934713408
    %v1599 = vunpack.c.0.s8 %v1598
    %v1600 = vperm.slane %v1592, %v1599
    %v1601 = vrot.slane %v1584, 4
    %v1602 = vsel %vm280, 0.0, %v1601
    %v1603 = vrot.slane %v1588, 4
    %v1604 = vsel %vm280, 0.0, %v1603
    %v1605 = vrot.slane %v1596, 4
    %v1606 = vsel %vm280, 0.0, %v1605
    %v1607 = vrot.slane %v1600, 4
    %v1608 = vsel %vm280, 0.0, %v1607
    %v1609 = vsel %vm280, %v1603, %v1584
    %v1611 = vunpack.c.l.s4 1983009808
    %v1612 = vunpack.c.0.s8 %v1611
    %v1613 = vperm.slane %v1609, %v1612
    %v1614 = vrot.slane %v1604, 4
    %v1615 = vsel %vm280, %v1614, %v1602
    %v1617 = vunpack.c.l.s4 1983009808
    %v1618 = vunpack.c.0.s8 %v1617
    %v1619 = vperm.slane %v1615, %v1618
    %v1620 = vsel %vm280, %v1607, %v1596
    %v1622 = vunpack.c.l.s4 1983009808
    %v1623 = vunpack.c.0.s8 %v1622
    %v1624 = vperm.slane %v1620, %v1623
    %v1625 = vrot.slane %v1608, 4
    %v1626 = vsel %vm280, %v1625, %v1606
    %v1628 = vunpack.c.l.s4 1983009808
    %v1629 = vunpack.c.0.s8 %v1628
    %v1630 = vperm.slane %v1626, %v1629
    %v1631 = vrot.slane %v1619, 4
    %v1632 = vsel %vm280, %v1631, %v1613
    %v1633 = vrot.slane %v1613, 4
    %v1634 = vsel %vm280, %v1619, %v1633
    %v1636 = vunpack.c.l.s4 1934713408
    %v1637 = vunpack.c.0.s8 %v1636
    %v1638 = vperm.slane %v1632, %v1637
    %v1640 = vunpack.c.l.s4 1934713408
    %v1641 = vunpack.c.0.s8 %v1640
    %v1642 = vperm.slane %v1634, %v1641
    %v1643 = vrot.slane %v1630, 4
    %v1644 = vsel %vm280, %v1643, %v1624
    %v1645 = vrot.slane %v1624, 4
    %v1646 = vsel %vm280, %v1630, %v1645
    %v1648 = vunpack.c.l.s4 1934713408
    %v1649 = vunpack.c.0.s8 %v1648
    %v1650 = vperm.slane %v1644, %v1649
    %v1652 = vunpack.c.l.s4 1934713408
    %v1653 = vunpack.c.0.s8 %v1652
    %v1654 = vperm.slane %v1646, %v1653
    %v1655 = vrot.slane %v1650, 4
    %v1656 = vsel %vm280, %v1655, %v1638
    %v1657 = vrot.slane %v1638, 4
    %v1658 = vsel %vm280, %v1650, %v1657
    %v1659 = vrot.slane %v1654, 4
    %v1660 = vsel %vm280, %v1659, %v1642
    %v1661 = vrot.slane %v1642, 4
    %v1662 = vsel %vm280, %v1654, %v1661
    %1664 = vrot.lane.b32.xlu0 %v1658, 8
    %v1665 = vpop.permute.xlu0 %1664
    %1668 = vrot.lane.b32.xlu0 %v1660, 16
    %v1669 = vpop.permute.xlu0 %1668
    %1672 = vrot.lane.b32.xlu0 %v1662, 24
    %v1673 = vpop.permute.xlu0 %1672
    %v1675 = vsel %vm638, %v1656, %v1665
    %v1676 = vsel %vm972, %v1675, %v1669
    %v1677 = vsel %vm974, %v1676, %v1673
    %v1678 = vpack.c.bf16 %v1677, %v975
    %v1679 = vld [vmem:[#allocation13] sm:$0xf]
    %v1680 = vld [vmem:[#allocation13 + $0x4] sm:$0xf]
    %v1681 = vld [vmem:[#allocation13 + $0x8] sm:$0xf]
    %v1682 = vld [vmem:[#allocation13 + $0xc] sm:$0xf]
    %v1687 = vunpack.c.l.b16 %v1679
    %v1688 = vunpack.c.l.b16 %v1680
    %v1689 = vunpack.c.l.b16 %v1681
    %v1690 = vunpack.c.l.b16 %v1682
    %v1691 = vpack.c.b16 %v1688, %v1687
    %v1692 = vpack.c.b16 %v1690, %v1689
    %v1696 = vsel %vm175, %v1678, 0
    %1698 = vmatpush.bf16.msra.mxu0 0
    %1699 = vmatpush.bf16.msra.mxu0 0
    %1700 = vmatpush.bf16.msra.mxu0 0
    %1701 = vmatpush.bf16.msra.mxu0 0
    %1702 = vmatpush.bf16.msra.mxu0 0
    %1703 = vmatpush.bf16.msra.mxu0 0
    %1704 = vmatpush.bf16.msra.mxu0 %v1692
    %1705 = vmatpush.bf16.msra.mxu0 %v1691
    %1706 = vmatmul.bf16.gmra.mxu0 %v1696
    %v1707 = vpop.f32.mrf.mxu0
    %v1708 = vadd.f32 %v152, %v1707
    %v1709 = vpop.f32.mrf.mxu0
    %v1710 = vadd.f32 %v153, %v1709
    %1711 = vdwg.mxu0
    %v1712 = vsel %vm175, %v1708, 0.0
    %1713 = vadd.xlane.f32.xlu0 %v1712
    %v1714 = vpop.xlane.xlu0 %1713
    %v1715 = vsel %vm175, %v1710, 0.0
    %1716 = vadd.xlane.f32.xlu0 %v1715
    %v1717 = vpop.xlane.xlu0 %1716
    %v1718 = vrcp.pop 32.0
    %v1719 = vmul.f32 32.0, %v1718
    %v1720 = vsub.f32 1.0, %v1719
    %v1721 = vmul.f32 %v1718, %v1720
    %v1722 = vadd.f32 %v1718, %v1721
    %vm1723 = vweird.f32 %v1718
    %v1724 = vsel %vm1723, %v1718, %v1722
    %v1725 = vmul.f32 %v1714, %v1724
    %v1726 = vmul.f32 %v1717, %v1724
    %v1727 = vsub.f32 %v1708, %v1725
    %v1728 = vsub.f32 %v1710, %v1726
    %v1729 = vmul.f32 %v1727, %v1727
    %v1730 = vmul.f32 %v1728, %v1728
    %v1731 = vsel %vm175, %v1729, 0.0
    %1732 = vadd.xlane.f32.xlu0 %v1731
    %v1733 = vpop.xlane.xlu0 %1732
    %v1734 = vsel %vm175, %v1730, 0.0
    %1735 = vadd.xlane.f32.xlu0 %v1734
    %v1736 = vpop.xlane.xlu0 %1735
    %v1737 = vmul.f32 %v1733, %v1724
    %v1738 = vmul.f32 %v1736, %v1724
    %v1739 = vadd.f32 %v1737, 1e-06
    %v1740 = vadd.f32 %v1738, 1e-06
    %v1741 = vrsqrt.pop %v1739
    %v1742 = vmul.f32 %v1741, %v1739
    %v1743 = vmul.f32 %v1742, %v1741
    %v1744 = vmul.f32 0.5, %v1743
    %v1745 = vsub.f32 1.5, %v1744
    %v1746 = vmul.f32 %v1741, %v1745
    %vm1747 = vweird.f32 %v1739
    %vm1748 = vweird.f32 %v1741
    %vm1749 = vmor %vm1747, %vm1748
    %v1750 = vsel %vm1749, %v1741, %v1746
    %v1751 = vrsqrt.pop %v1740
    %v1752 = vmul.f32 %v1751, %v1740
    %v1753 = vmul.f32 %v1752, %v1751
    %v1754 = vmul.f32 0.5, %v1753
    %v1755 = vsub.f32 1.5, %v1754
    %v1756 = vmul.f32 %v1751, %v1755
    %vm1757 = vweird.f32 %v1740
    %vm1758 = vweird.f32 %v1751
    %vm1759 = vmor %vm1757, %vm1758
    %v1760 = vsel %vm1759, %v1751, %v1756
    %v1761 = vmul.f32 %v1727, %v1750
    %v1762 = vmul.f32 %v1728, %v1760
    %v1763 = vld [vmem:[%s7] sm:$0x1]
    %v1765 = vperm.slane %v1763, 0
    %v1767 = vmul.f32 %v1761, %v1765
    %v1768 = vmul.f32 %v1762, %v1765
    %v1769 = vld [vmem:[%s8] sm:$0x1]
    %v1771 = vperm.slane %v1769, 0
    %v1773 = vadd.f32 %v1767, %v1771
    %v1774 = vadd.f32 %v1768, %v1771
    %1775 = vst.msk [vmem:[#allocation14] sm:$0xff] %vm175, %v1773
    %1776 = vst.msk [vmem:[#allocation14 + $0x8] sm:$0xff] %vm175, %v1774
    // Predicated region
    $region66: #{tpu_custom_call.1} parent=1 // pred_check
      _
    $region67: #{tpu_custom_call.1} parent=1 // pred_check_branch
      %1778 = sbr.rel (0) target = $region69
    $region68: #{tpu_custom_call.1} parent=1 // pred_region
      %1780 = vsyncadd [#allocation4], 0
      %s1781 = sshll.u32 [#allocation14], 4
      %s1782 = int_to_ptr.vmem [resolvable:$true] %s1781
      %s1783 = sshll.u32 %s9, 4
      %s1784 = int_to_ptr.hbm [resolvable:$true] %s1783
      %1789 = dma.vmem_to_hbm [thread:$0]  %s1782, 256, %s1784, [#allocation4], 128, 128, 8
    $region69: #{tpu_custom_call.1} parent=1 // pred_fallthru
      _
    // Predicated region
    $region70: #{tpu_custom_call.1} parent=1 // pred_check
      _
    $region71: #{tpu_custom_call.1} parent=1 // pred_check_branch
      %1791 = sbr.rel (0) target = $region73
    $region72: #{tpu_custom_call.1} parent=1 // pred_region
      %1793 = vsyncadd [#allocation16], 0
      %s1794 = sshll.u32 [#allocation15], 4
      %s1795 = int_to_ptr.vmem [resolvable:$true] %s1794
      %s1796 = sshll.u32 %s10, 4
      %s1797 = int_to_ptr.hbm [resolvable:$true] %s1796
      %1802 = dma.vmem_to_hbm [thread:$0]  %s1795, 512, %s1797, [#allocation16], 64, 64, 4
    $region73: #{tpu_custom_call.1} parent=1 // pred_fallthru
      _
    // Predicated region
    $region74: #{tpu_custom_call.1} parent=1 // pred_check
      _
    $region75: #{tpu_custom_call.1} parent=1 // pred_check_branch
      %1804 = sbr.rel (0) target = $region77
    $region76: #{tpu_custom_call.1} parent=1 // pred_region
      %1806 = dma.done [#allocation4], 256
    $region77: #{tpu_custom_call.1} parent=1 // pred_fallthru
      _
    // Predicated region
    $region78: #{tpu_custom_call.1} parent=1 // pred_check
      _
    $region79: #{tpu_custom_call.1} parent=1 // pred_check_branch
      %1808 = sbr.rel (0) target = $region81
    $region80: #{tpu_custom_call.1} parent=1 // pred_region
      %1810 = dma.done [#allocation16], 512
    $region81: #{tpu_custom_call.1} parent=1 // pred_fallthru
      _
    %1811 = vsyncpa [#allocation3], 1
    %1812 = vsyncpa [#allocation6], 1
    %1813 = vsyncpa [#allocation9], 1
    %1814 = vsyncpa [#allocation12], 1
    %1815 = vsyncpa [#allocation4], 1
    %1816 = vsyncpa [#allocation16], 1

</llo_original>
